<compile_context>
chip_gen: v7x
topology: tpu7x:2x2x1
jax: 0.10.0
libtpu: 0.0.40
codegen_flags: <defaults>
</compile_context>

<pallas_src>
from functools import partial

import jax
import jax.numpy as jnp
from jax.experimental import pallas as pl
from jax.experimental.pallas import tpu as pltpu


def _vmem_limit_bytes():
    cap = 64 * 1024 * 1024  # conservative default (v7x physical VMEM)
    try:
        info = pltpu.get_tpu_info()
        cap = int(getattr(info, "vmem_capacity_bytes", cap))
    except Exception:
        pass
    return int(min(cap * 3 // 4, 96 * 1024 * 1024))


_VMEM_LIMIT = _vmem_limit_bytes()
_PAD = 256                       # pad N to a multiple of 256: bf16 (16,128)-tile friendly
_RESIDENT_BYTES = 4 * 1024 * 1024  # keep a full RHS operand VMEM-resident below this size


def _pick_tile(n, target, align):
    """Largest multiple of `align` that divides n and is <= max(target, align)."""
    target = max(target, align)
    if n <= target:
        return n
    t = (min(target, n) // align) * align
    while t >= align:
        if n % t == 0:
            return t
        t -= align
    return n  # unreachable: n is always padded to a multiple of _PAD


# ----------------------------------------------------------------------------
# Fused propagation (W resident in VMEM, all steps of a phase in one call):
#   Y <- c0 * Y + B + (a*lam) * diag(s) (W @ (diag(s) Y))
# ----------------------------------------------------------------------------
def _fused_prop_kernel(w_ref, s_ref, b_ref, y0_ref, out_ref, *, c0, alp_lam, steps):
    y = y0_ref[...]
    for _ in range(steps):  # static small trip count; W stays VMEM-resident across steps
        ys = (s_ref[...] * y).astype(jnp.bfloat16)
        agg = jnp.dot(w_ref[...], ys, preferred_element_type=jnp.float32)
        y = c0 * y + b_ref[...] + (alp_lam * s_ref[...]) * agg
    out_ref[...] = y


def propagate_fused(w_bf16, s, b, y0, c0, alp_lam, steps):
    n, d = y0.shape
    kernel = partial(_fused_prop_kernel, c0=float(c0), alp_lam=float(alp_lam),
                     steps=int(steps))
    vmem = pl.BlockSpec(memory_space=pltpu.MemorySpace.VMEM)
    return pl.pallas_call(
        kernel,
        out_shape=jax.ShapeDtypeStruct((n, d), jnp.float32),
        in_specs=[vmem, vmem, vmem, vmem],
        out_specs=vmem,
        compiler_params=pltpu.CompilerParams(vmem_limit_bytes=_VMEM_LIMIT),
    )(w_bf16, s, b, y0)


# ----------------------------------------------------------------------------
# Tiled single propagation step (fallback for graphs whose W does not fit VMEM):
# raw bf16 W streamed in (tm, tk) tiles, normalisation fused in-kernel,
# f32 output-resident accumulator across the k axis.
# ----------------------------------------------------------------------------
def _prop_step_kernel(w_ref, ys_ref, yi_ref, b_ref, si_ref, out_ref, *,
                      c0, alp_lam, tk, y_resident):
    k = pl.program_id(1)

    @pl.when(k == 0)
    def _init():
        out_ref[...] = jnp.zeros_like(out_ref)

    if y_resident:
        start = pl.multiple_of(k * tk, tk)
        rhs = ys_ref[pl.ds(start, tk), :]
    else:
        rhs = ys_ref[...]
    out_ref[...] += jnp.dot(w_ref[...], rhs, preferred_element_type=jnp.float32)

    @pl.when(k == pl.num_programs(1) - 1)
    def _finalize():
        out_ref[...] = c0 * yi_ref[...] + b_ref[...] + (alp_lam * si_ref[...]) * out_ref[...]


def propagate_step(w_bf16, ys_bf16, y, b, s, c0, alp_lam, *, y_resident=None):
    n, d = y.shape
    tm = _pick_tile(n, 512, 16)           # bf16 W rows: 16-sublane aligned
    if n // tm < 2:                        # keep >= 2 row blocks for v7x's two TensorCores
        tm = _pick_tile(n, max(n // 2, 16), 16)
    tk = _pick_tile(n, 2048, 128)
    if y_resident is None:
        y_resident = (n * d * 2) <= _RESIDENT_BYTES
    if y_resident:
        ys_spec = pl.BlockSpec((n, d), lambda i, k: (0, 0))   # resident, fetched once
    else:
        ys_spec = pl.BlockSpec((tk, d), lambda i, k: (k, 0))  # streamed col blocks
    kernel = partial(_prop_step_kernel, c0=float(c0), alp_lam=float(alp_lam),
                     tk=tk, y_resident=bool(y_resident))
    return pl.pallas_call(
        kernel,
        out_shape=jax.ShapeDtypeStruct((n, d), jnp.float32),
        grid=(n // tm, n // tk),
        in_specs=[
            pl.BlockSpec((tm, tk), lambda i, k: (i, k)),   # raw W tile (bf16)
            ys_spec,                                       # s*Y (bf16) matmul RHS
            pl.BlockSpec((tm, d), lambda i, k: (i, 0)),    # Y row block (f32, epilogue)
            pl.BlockSpec((tm, d), lambda i, k: (i, 0)),    # bias row block (f32)
            pl.BlockSpec((tm, 1), lambda i, k: (i, 0)),    # s row block (f32)
        ],
        out_specs=pl.BlockSpec((tm, d), lambda i, k: (i, 0)),
        compiler_params=pltpu.CompilerParams(
            dimension_semantics=("parallel", "arbitrary"),
            vmem_limit_bytes=_VMEM_LIMIT,
        ),
    )(w_bf16, ys_bf16, y, b, s)


# ----------------------------------------------------------------------------
# Attention: tiled Gram-matrix pairwise distances + edge reweighting.
# Second output = weighted in-degree, accumulated in-kernel (lane-dense (tm,128)
# block revisited across j), so W is never re-read from HBM for the row-sum.
# ----------------------------------------------------------------------------
def _attention_kernel(yi_ref, yj_ref, sqi_ref, sqj_ref, adj_ref, w_ref, deg_ref, *,
                      tau, T, p, tn, yj_resident):
    j = pl.program_id(1)

    @pl.when(j == 0)
    def _init():
        deg_ref[...] = jnp.zeros_like(deg_ref)

    if yj_resident:
        start = pl.multiple_of(j * tn, tn)
        yj = yj_ref[pl.ds(start, tn), :]
    else:
        yj = yj_ref[...]
    # Yi @ Yj.T on the MXU (bf16 operands, f32 accumulate).
    g = jax.lax.dot_general(yi_ref[...], yj,
                            dimension_numbers=(((1,), (1,)), ((), ())),
                            preferred_element_type=jnp.float32)       # (tm, tn)
    d2 = jnp.maximum(sqi_ref[...] + sqj_ref[...] - 2.0 * g, 0.0)      # clamp round-off negatives
    t2 = max(tau * tau, 1e-12)
    d2c = jnp.maximum(d2, t2)                                         # max(z, tau) in squared domain
    if p == 2.0:
        w = jnp.ones_like(d2c)
    elif p == 1.0:
        w = jax.lax.rsqrt(d2c)                                        # max(z, tau)^-1
    elif p == 0.0:
        w = pl.reciprocal(d2c, approx=True)                           # max(z, tau)^-2
    else:
        w = jnp.exp((0.5 * (p - 2.0)) * jnp.log(d2c))                 # general max(z, tau)^(p-2)
    if T > 0:
        w = jnp.where(d2 > T * T, 0.0, w)                             # z > T  <=>  d2 > T^2
    w = w * adj_ref[...].astype(jnp.float32)                          # only existing edges keep weight
    w_ref[...] = w.astype(w_ref.dtype)
    deg_ref[...] += jnp.sum(w, axis=1, keepdims=True)                 # broadcast over the 128 lanes


def attention(y, eta, adj_bf16, tau, T, p):
    n, d = y.shape
    tm = _pick_tile(n, 512, 16)
    if n // tm < 2:
        tm = _pick_tile(n, max(n // 2, 16), 16)
    tn = _pick_tile(n, 2048, 128)
    ye32 = y * eta
    sq = jnp.sum(ye32 * ye32, axis=1)        # squared norms in f32 (before bf16 cast)
    sq_col = sq.reshape(n, 1)
    sq_row = sq.reshape(1, n)
    ye = ye32.astype(jnp.bfloat16)
    yj_resident = (n * d * 2) <= _RESIDENT_BYTES
    yj_spec = (pl.BlockSpec((n, d), lambda i, j: (0, 0)) if yj_resident
               else pl.BlockSpec((tn, d), lambda i, j: (j, 0)))
    kernel = partial(_attention_kernel, tau=float(tau), T=float(T), p=float(p),
                     tn=tn, yj_resident=bool(yj_resident))
    w, deg128 = pl.pallas_call(
        kernel,
        out_shape=(jax.ShapeDtypeStruct((n, n), jnp.bfloat16),
                   jax.ShapeDtypeStruct((n, 128), jnp.float32)),
        grid=(n // tm, n // tn),
        in_specs=[
            pl.BlockSpec((tm, d), lambda i, j: (i, 0)),    # eta*Y row block (bf16)
            yj_spec,                                       # eta*Y col operand (bf16)
            pl.BlockSpec((tm, 1), lambda i, j: (i, 0)),    # |yi|^2 (f32)
            pl.BlockSpec((1, tn), lambda i, j: (0, j)),    # |yj|^2 (f32, lane oriented)
            pl.BlockSpec((tm, tn), lambda i, j: (i, j)),   # structural adjacency mask (bf16)
        ],
        out_specs=(pl.BlockSpec((tm, tn), lambda i, j: (i, j)),
                   pl.BlockSpec((tm, 128), lambda i, j: (i, 0))),     # in-degree accumulator
        compiler_params=pltpu.CompilerParams(
            dimension_semantics=("parallel", "arbitrary"),
            vmem_limit_bytes=_VMEM_LIMIT,
        ),
    )(ye, ye, sq_col, sq_row, adj_bf16)
    deg = deg128[:, :1]
    return w, deg


# ----------------------------------------------------------------------------
# Module-equivalent wrapper
# ----------------------------------------------------------------------------
class UnfoldindAndAttention:
    def __init__(self, d, alp, lam, prop_step, attn_aft, tau, T, p,
                 use_eta, init_att, attn_dropout, precond):
        self.d = d
        self.alp = alp if alp > 0 else 1.0 / (lam + 1.0)
        self.lam = lam
        self.tau = tau
        self.T = T
        self.p = p
        self.prop_step = prop_step
        self.attn_aft = attn_aft
        self.use_eta = use_eta
        self.init_att = init_att
        self.precond = precond
        # deterministic parameter init: etas = ones(d); dropout = inference identity
        self.etas = jnp.ones((1, d), dtype=jnp.float32) if use_eta else None

    def _phase_params(self, deg, x):
        """deg-derived scalars, recomputed only when attention reweights the graph."""
        alp, lam = self.alp, self.lam
        if self.precond:
            dt = lam * deg + 1.0                    # (lam*D + I)
            s = jax.lax.rsqrt(dt)                   # (lam*D + I)^-1/2
            b = alp * x / dt                        # a * (lam*D + I)^-1 X
            c0 = 1.0 - alp
        else:
            s = jnp.where(deg > 0.0, jax.lax.rsqrt(jnp.maximum(deg, 1e-12)), 0.0)
            b = alp * x
            c0 = 1.0 - alp - alp * lam
        return s, b, c0

    def _run_segment(self, w_bf16, s, b, c0, y, steps):
        if steps <= 0:
            return y
        n, d = y.shape
        alp_lam = self.alp * self.lam
        fused_bytes = n * n * 2 + 12 * n * d * 4
        if fused_bytes <= _VMEM_LIMIT // 2:
            # W fits in VMEM: one pallas_call for the whole segment (W streamed once).
            return propagate_fused(w_bf16, s, b, y, c0, alp_lam, steps)
        # Large-graph fallback: stream W tiles once per step.
        for _ in range(steps):
            ys = (s * y).astype(jnp.bfloat16)
            y = propagate_step(w_bf16, ys, y, b, s, c0, alp_lam)
        return y

    def __call__(self, adj, x):
        adj = adj.astype(jnp.float32)
        x = x.astype(jnp.float32)
        n0, d = x.shape
        # Zero-pad the node count to a multiple of 256: padded nodes have no edges, zero
        # features and zero bias, so they are exact no-ops for attention and propagation.
        n = ((n0 + _PAD - 1) // _PAD) * _PAD
        if n != n0:
            adj = jnp.pad(adj, ((0, n - n0), (0, n - n0)))
            x = jnp.pad(x, ((0, n - n0), (0, 0)))
        eta = self.etas if self.etas is not None else jnp.ones((1, d), jnp.float32)
        adj_bf = adj.astype(jnp.bfloat16)           # 0/1 mask, exact in bf16

        w = adj_bf                                  # g.edata['w'] = ones -> weighted adj == structural adj
        deg = jnp.sum(adj, axis=1, keepdims=True)   # g.in_degrees().float()

        y = x
        if self.init_att:
            w, deg = attention(y, eta, adj_bf, self.tau, self.T, self.p)

        attn_at = self.attn_aft if self.attn_aft is not None else -1
        if 0 < attn_at <= self.prop_step:
            first, second = attn_at, self.prop_step - attn_at
        else:
            first, second = self.prop_step, 0

        s, b, c0 = self._phase_params(deg, x)
        y = self._run_segment(w, s, b, c0, y, first)
        if second > 0:
            w, deg = attention(y, eta, adj_bf, self.tau, self.T, self.p)
            s, b, c0 = self._phase_params(deg, x)
            y = self._run_segment(w, s, b, c0, y, second)
        return y[:n0]


# ----------------------------------------------------------------------------
if __name__ == "__main__":
    key = jax.random.PRNGKey(0)
    N, d = 16, 32

    k_x, k_a = jax.random.split(key)
    X = jax.random.normal(k_x, (N, d), dtype=jnp.float32)

    # deterministic small directed graph: ~30% edge density, no self loops
    adj = (jax.random.uniform(k_a, (N, N)) < 0.3).astype(jnp.float32)
    adj = adj * (1.0 - jnp.eye(N, dtype=jnp.float32))

    model = UnfoldindAndAttention(
        d=d, alp=0.0, lam=1.0, prop_step=4, attn_aft=2,
        tau=0.5, T=2.0, p=1.0, use_eta=True, init_att=True,
        attn_dropout=0.0, precond=True,
    )

    run = jax.jit(lambda a, xx: model(a, xx))
    Y = run(adj, X)
    Y = jax.block_until_ready(Y)
    assert Y.shape == (N, d)
    assert bool(jnp.all(jnp.isfinite(Y)))

    # Also exercise the tiled (large-N fallback) propagation kernel at small shape so both
    # the resident-RHS and streamed-RHS code paths are compile/runtime checked on TPU.
    n_pad = _PAD
    adj_p = jnp.pad(adj, ((0, n_pad - N), (0, n_pad - N)))
    x_p = jnp.pad(X, ((0, n_pad - N), (0, 0)))
    deg_p = jnp.sum(adj_p, axis=1, keepdims=True)
    s_p = jax.lax.rsqrt(deg_p + 1.0)
    ys_p = (s_p * x_p).astype(jnp.bfloat16)
    for resident in (True, False):
        y_t = propagate_step(adj_p.astype(jnp.bfloat16), ys_p, x_p, 0.5 * x_p, s_p,
                             0.5, 0.5, y_resident=resident)
        y_t = jax.block_until_ready(y_t)
        assert bool(jnp.all(jnp.isfinite(y_t)))

    print("KERNEL_OK")
</pallas_src>

<mosaic_0001>
module attributes {stable_mosaic.version = 11 : i64} {
  func.func @_attention_kernel(%arg0: i32, %arg1: i32, %arg2: memref<128x32xbf16, #tpu.memory_space<vmem>>, %arg3: memref<256x32xbf16, #tpu.memory_space<vmem>>, %arg4: memref<128x1xf32, #tpu.memory_space<vmem>>, %arg5: memref<1x256xf32, #tpu.memory_space<vmem>>, %arg6: memref<128x256xbf16, #tpu.memory_space<vmem>>, %arg7: memref<128x256xbf16, #tpu.memory_space<vmem>>, %arg8: memref<128x128xf32, #tpu.memory_space<vmem>>) attributes {dimension_semantics = [#tpu.dimension_semantics<parallel>, #tpu.dimension_semantics<arbitrary>], iteration_bounds = array<i64: 2, 1>, scalar_prefetch = 0 : i64, scratch_operands = 0 : i64, tpu.core_type = #tpu.core_type<tc>, window_params = [{transform_indices = @transform_0, window_bounds = array<i64: 128, 32>}, {pipeline_mode = #tpu.pipeline_mode<synchronous>, transform_indices = @transform_1, window_bounds = array<i64: 256, 32>}, {transform_indices = @transform_2, window_bounds = array<i64: 128, 1>}, {transform_indices = @transform_3, window_bounds = array<i64: 1, 256>}, {transform_indices = @transform_4, window_bounds = array<i64: 128, 256>}, {transform_indices = @transform_5, window_bounds = array<i64: 128, 256>}, {transform_indices = @transform_6, window_bounds = array<i64: 128, 128>}]} {
    %c0_i32 = arith.constant 0 : i32
    %0 = arith.cmpi eq, %arg1, %c0_i32 : i32
    %1 = arith.extui %0 : i1 to i32
    %c0_i32_0 = arith.constant 0 : i32
    %2 = arith.cmpi ne, %1, %c0_i32_0 : i32
    scf.if %2 {
      %cst_21 = arith.constant 0.000000e+00 : f32
      %37 = vector.broadcast %cst_21 : f32 to vector<128x128xf32>
      %c0_22 = arith.constant 0 : index
      %c0_23 = arith.constant 0 : index
      %38 = vector.load %arg8[%c0_22, %c0_23] : memref<128x128xf32, #tpu.memory_space<vmem>>, vector<128x128xf32>
      tpu.vector_store %arg8[%c0_22, %c0_23], %37 {strides = array<i32>} : memref<128x128xf32, #tpu.memory_space<vmem>>, vector<128x128xf32>,
    } else {
    }
    %c256_i32 = arith.constant 256 : i32
    %3 = arith.muli %arg1, %c256_i32 : i32
    %4 = tpu.assume_multiple %3, 256 : i32
    %5 = arith.index_cast %4 : i32 to index
    %c0 = arith.constant 0 : index
    %6 = vector.load %arg3[%5, %c0] : memref<256x32xbf16, #tpu.memory_space<vmem>>, vector<256x32xbf16>
    %c0_1 = arith.constant 0 : index
    %c0_2 = arith.constant 0 : index
    %7 = vector.load %arg2[%c0_1, %c0_2] : memref<128x32xbf16, #tpu.memory_space<vmem>>, vector<128x32xbf16>
    %cst = arith.constant dense<0.000000e+00> : vector<128x256xf32>
    %8 = tpu.matmul %7, %6, %cst {dimension_numbers = #tpu.dot_dimension_numbers<[1], [1], [0], [0], [0, 0, 1, 0], [], []>} : vector<128x32xbf16>, vector<256x32xbf16>, vector<128x256xf32> -> vector<128x256xf32>
    %c0_3 = arith.constant 0 : index
    %c0_4 = arith.constant 0 : index
    %9 = vector.load %arg4[%c0_3, %c0_4] : memref<128x1xf32, #tpu.memory_space<vmem>>, vector<128x1xf32>
    %c0_5 = arith.constant 0 : index
    %c0_6 = arith.constant 0 : index
    %10 = vector.load %arg5[%c0_5, %c0_6] : memref<1x256xf32, #tpu.memory_space<vmem>>, vector<1x256xf32>
    %11 = vector.broadcast %9 : vector<128x1xf32> to vector<128x256xf32>
    %12 = vector.broadcast %10 : vector<1x256xf32> to vector<128x256xf32>
    %13 = arith.addf %11, %12 : vector<128x256xf32>
    %cst_7 = arith.constant 2.000000e+00 : f32
    %14 = vector.broadcast %cst_7 : f32 to vector<128x256xf32>
    %15 = arith.mulf %14, %8 : vector<128x256xf32>
    %16 = arith.subf %13, %15 : vector<128x256xf32>
    %cst_8 = arith.constant 0.000000e+00 : f32
    %17 = vector.broadcast %cst_8 : f32 to vector<128x256xf32>
    %18 = arith.maximumf %16, %17 : vector<128x256xf32>
    %cst_9 = arith.constant 2.500000e-01 : f32
    %19 = vector.broadcast %cst_9 : f32 to vector<128x256xf32>
    %20 = arith.maximumf %18, %19 : vector<128x256xf32>
    %21 = math.rsqrt %20 : vector<128x256xf32>
    %cst_10 = arith.constant 4.000000e+00 : f32
    %22 = vector.broadcast %cst_10 : f32 to vector<128x256xf32>
    %23 = arith.cmpf ogt, %18, %22 : vector<128x256xf32>
    %cst_11 = arith.constant 0.000000e+00 : f32
    %24 = vector.broadcast %cst_11 : f32 to vector<128x256xf32>
    %25 = arith.select %23, %24, %21 : vector<128x256xi1>, vector<128x256xf32>
    %c0_12 = arith.constant 0 : index
    %c0_13 = arith.constant 0 : index
    %26 = vector.load %arg6[%c0_12, %c0_13] : memref<128x256xbf16, #tpu.memory_space<vmem>>, vector<128x256xbf16>
    %27 = arith.extf %26 : vector<128x256xbf16> to vector<128x256xf32>
    %28 = arith.mulf %25, %27 : vector<128x256xf32>
    %29 = arith.truncf %28 : vector<128x256xf32> to vector<128x256xbf16>
    %c0_14 = arith.constant 0 : index
    %c0_15 = arith.constant 0 : index
    %30 = vector.load %arg7[%c0_14, %c0_15] : memref<128x256xbf16, #tpu.memory_space<vmem>>, vector<128x256xbf16>
    tpu.vector_store %arg7[%c0_14, %c0_15], %29 {strides = array<i32>} : memref<128x256xbf16, #tpu.memory_space<vmem>>, vector<128x256xbf16>,
    %c0_16 = arith.constant 0 : index
    %c0_17 = arith.constant 0 : index
    %31 = vector.load %arg8[%c0_16, %c0_17] : memref<128x128xf32, #tpu.memory_space<vmem>>, vector<128x128xf32>
    %cst_18 = arith.constant dense<0.000000e+00> : vector<128xf32>
    %32 = vector.multi_reduction <add>, %28, %cst_18 [1] : vector<128x256xf32> to vector<128xf32>
    %33 = vector.shape_cast %32 : vector<128xf32> to vector<128x1xf32>
    %34 = vector.broadcast %33 : vector<128x1xf32> to vector<128x128xf32>
    %35 = arith.addf %31, %34 : vector<128x128xf32>
    %c0_19 = arith.constant 0 : index
    %c0_20 = arith.constant 0 : index
    %36 = vector.load %arg8[%c0_19, %c0_20] : memref<128x128xf32, #tpu.memory_space<vmem>>, vector<128x128xf32>
    tpu.vector_store %arg8[%c0_19, %c0_20], %35 {strides = array<i32>} : memref<128x128xf32, #tpu.memory_space<vmem>>, vector<128x128xf32>,
    return
  }
  func.func @transform_0(%arg0: i32, %arg1: i32) -> (i32, i32) {
    %c0_i32 = arith.constant 0 : i32
    %c0_i32_0 = arith.constant 0 : i32
    return %arg0, %c0_i32 : i32, i32
  }
  func.func @transform_1(%arg0: i32, %arg1: i32) -> (i32, i32) {
    %c0_i32 = arith.constant 0 : i32
    %c0_i32_0 = arith.constant 0 : i32
    %c0_i32_1 = arith.constant 0 : i32
    return %c0_i32, %c0_i32_0 : i32, i32
  }
  func.func @transform_2(%arg0: i32, %arg1: i32) -> (i32, i32) {
    %c0_i32 = arith.constant 0 : i32
    %c0_i32_0 = arith.constant 0 : i32
    return %arg0, %c0_i32 : i32, i32
  }
  func.func @transform_3(%arg0: i32, %arg1: i32) -> (i32, i32) {
    %c0_i32 = arith.constant 0 : i32
    %c0_i32_0 = arith.constant 0 : i32
    return %c0_i32, %arg1 : i32, i32
  }
  func.func @transform_4(%arg0: i32, %arg1: i32) -> (i32, i32) {
    %c0_i32 = arith.constant 0 : i32
    return %arg0, %arg1 : i32, i32
  }
  func.func @transform_5(%arg0: i32, %arg1: i32) -> (i32, i32) {
    %c0_i32 = arith.constant 0 : i32
    return %arg0, %arg1 : i32, i32
  }
  func.func @transform_6(%arg0: i32, %arg1: i32) -> (i32, i32) {
    %c0_i32 = arith.constant 0 : i32
    %c0_i32_0 = arith.constant 0 : i32
    return %arg0, %c0_i32 : i32, i32
  }
}

module attributes {stable_mosaic.version = 11 : i64} {
  func.func @_fused_prop_kernel(%arg0: memref<256x256xbf16, #tpu.memory_space<vmem>>, %arg1: memref<256x1xf32, #tpu.memory_space<vmem>>, %arg2: memref<256x32xf32, #tpu.memory_space<vmem>>, %arg3: memref<256x32xf32, #tpu.memory_space<vmem>>, %arg4: memref<256x32xf32, #tpu.memory_space<vmem>>) attributes {dimension_semantics = [], scalar_prefetch = 0 : i64, scratch_operands = 0 : i64, tpu.core_type = #tpu.core_type<tc>} {
    %c0 = arith.constant 0 : index
    %c0_0 = arith.constant 0 : index
    %0 = vector.load %arg3[%c0, %c0_0] : memref<256x32xf32, #tpu.memory_space<vmem>>, vector<256x32xf32>
    %c0_1 = arith.constant 0 : index
    %c0_2 = arith.constant 0 : index
    %1 = vector.load %arg1[%c0_1, %c0_2] : memref<256x1xf32, #tpu.memory_space<vmem>>, vector<256x1xf32>
    %2 = vector.broadcast %1 : vector<256x1xf32> to vector<256x32xf32>
    %3 = arith.mulf %2, %0 : vector<256x32xf32>
    %4 = arith.truncf %3 : vector<256x32xf32> to vector<256x32xbf16>
    %c0_3 = arith.constant 0 : index
    %c0_4 = arith.constant 0 : index
    %5 = vector.load %arg0[%c0_3, %c0_4] : memref<256x256xbf16, #tpu.memory_space<vmem>>, vector<256x256xbf16>
    %cst = arith.constant dense<0.000000e+00> : vector<256x32xf32>
    %6 = tpu.matmul %5, %4, %cst {dimension_numbers = #tpu.dot_dimension_numbers<[1], [0], [0], [1], [0, 0, 1, 1], [], []>} : vector<256x256xbf16>, vector<256x32xbf16>, vector<256x32xf32> -> vector<256x32xf32>
    %cst_5 = arith.constant 5.000000e-01 : f32
    %7 = vector.broadcast %cst_5 : f32 to vector<256x32xf32>
    %8 = arith.mulf %7, %0 : vector<256x32xf32>
    %c0_6 = arith.constant 0 : index
    %c0_7 = arith.constant 0 : index
    %9 = vector.load %arg2[%c0_6, %c0_7] : memref<256x32xf32, #tpu.memory_space<vmem>>, vector<256x32xf32>
    %10 = arith.addf %8, %9 : vector<256x32xf32>
    %c0_8 = arith.constant 0 : index
    %c0_9 = arith.constant 0 : index
    %11 = vector.load %arg1[%c0_8, %c0_9] : memref<256x1xf32, #tpu.memory_space<vmem>>, vector<256x1xf32>
    %cst_10 = arith.constant 5.000000e-01 : f32
    %12 = vector.broadcast %cst_10 : f32 to vector<256x1xf32>
    %13 = arith.mulf %12, %11 : vector<256x1xf32>
    %14 = vector.broadcast %13 : vector<256x1xf32> to vector<256x32xf32>
    %15 = arith.mulf %14, %6 : vector<256x32xf32>
    %16 = arith.addf %10, %15 : vector<256x32xf32>
    %c0_11 = arith.constant 0 : index
    %c0_12 = arith.constant 0 : index
    %17 = vector.load %arg1[%c0_11, %c0_12] : memref<256x1xf32, #tpu.memory_space<vmem>>, vector<256x1xf32>
    %18 = vector.broadcast %17 : vector<256x1xf32> to vector<256x32xf32>
    %19 = arith.mulf %18, %16 : vector<256x32xf32>
    %20 = arith.truncf %19 : vector<256x32xf32> to vector<256x32xbf16>
    %c0_13 = arith.constant 0 : index
    %c0_14 = arith.constant 0 : index
    %21 = vector.load %arg0[%c0_13, %c0_14] : memref<256x256xbf16, #tpu.memory_space<vmem>>, vector<256x256xbf16>
    %cst_15 = arith.constant dense<0.000000e+00> : vector<256x32xf32>
    %22 = tpu.matmul %21, %20, %cst_15 {dimension_numbers = #tpu.dot_dimension_numbers<[1], [0], [0], [1], [0, 0, 1, 1], [], []>} : vector<256x256xbf16>, vector<256x32xbf16>, vector<256x32xf32> -> vector<256x32xf32>
    %cst_16 = arith.constant 5.000000e-01 : f32
    %23 = vector.broadcast %cst_16 : f32 to vector<256x32xf32>
    %24 = arith.mulf %23, %16 : vector<256x32xf32>
    %c0_17 = arith.constant 0 : index
    %c0_18 = arith.constant 0 : index
    %25 = vector.load %arg2[%c0_17, %c0_18] : memref<256x32xf32, #tpu.memory_space<vmem>>, vector<256x32xf32>
    %26 = arith.addf %24, %25 : vector<256x32xf32>
    %c0_19 = arith.constant 0 : index
    %c0_20 = arith.constant 0 : index
    %27 = vector.load %arg1[%c0_19, %c0_20] : memref<256x1xf32, #tpu.memory_space<vmem>>, vector<256x1xf32>
    %cst_21 = arith.constant 5.000000e-01 : f32
    %28 = vector.broadcast %cst_21 : f32 to vector<256x1xf32>
    %29 = arith.mulf %28, %27 : vector<256x1xf32>
    %30 = vector.broadcast %29 : vector<256x1xf32> to vector<256x32xf32>
    %31 = arith.mulf %30, %22 : vector<256x32xf32>
    %32 = arith.addf %26, %31 : vector<256x32xf32>
    %c0_22 = arith.constant 0 : index
    %c0_23 = arith.constant 0 : index
    %33 = vector.load %arg4[%c0_22, %c0_23] : memref<256x32xf32, #tpu.memory_space<vmem>>, vector<256x32xf32>
    tpu.vector_store %arg4[%c0_22, %c0_23], %32 {strides = array<i32>} : memref<256x32xf32, #tpu.memory_space<vmem>>, vector<256x32xf32>,
    return
  }
}

</mosaic_0001>

<llo_original>
// kernel: _lambda_.4
$region0: #{_lambda_.4}
  #allocation0 [shape = 'u32[]', space=smem, size = 0x4, offset = 0x4, fixed_abs, tag = 'smem constant byte address 0x4 - core index']
  #allocation1 [shape = 'u32[144,128]{1,0:T(1,128)}', space=vmem, size = 0x12000, scoped, tag = 'internal scratch']
  %s0 = inlined_call_operand.vmem [shape: bf16[256,32], index: 0, kind: input, shape index: {}, may-alias: {0,1}]
  %s1 = inlined_call_operand.vmem [shape: bf16[256,32], index: 1, kind: input, shape index: {}, may-alias: {0,1}]
  %s2 = inlined_call_operand.vmem [shape: f32[256,1], index: 2, kind: input, shape index: {}]
  %s3 = inlined_call_operand.vmem [shape: f32[1,256], index: 3, kind: input, shape index: {}]
  %s4 = inlined_call_operand.vmem [shape: bf16[256,256], index: 4, kind: input, shape index: {}]
  %s5 = inlined_call_operand.vmem [shape: bf16[256,256], index: 5, kind: output, shape index: {0}]
  %s6 = inlined_call_operand.vmem [shape: f32[256,128], index: 6, kind: output, shape index: {1}]
  %7 = xla_tuple %s5, %s6
  %s8 = sld [smem:[#allocation0]]
  $region65: #{_lambda_.4} parent=0
    _
  %s10 = ssub.s32 1, %s8
  %s11 = scalar_select 0, %s10, %s8
  loop: start=0, step=1, limit=4
  $region2: #{_lambda_.4} parent=0 // loop_pre_header
    _
  $region3: #{_lambda_.4} parent=0 // loop_header
    %s13 = sphi 0, %s17
    %p14 = scmp.ge.s32.totalorder %s13, 4
    %s20 = sphi 0, %s32
    %s21 = sphi 0, %s28
    %s22 = sphi 0, %s20
    %s23 = sphi 0, %s21
    %s24 = sphi 0, %s22
    %s25 = sphi 0, %s23
    %s35 = sphi 0, %s37
    %s38 = sphi 0, %s35
    %s39 = sphi 0, %s38
    %s55 = sphi 0, %s39
    %s59 = sphi 0, %s59
    %s61 = sphi 0, %s59
    %s62 = sphi 0, %s61
    %s76 = sphi 0, %s62
    %s82 = sphi 0, %s84
    %s85 = sphi 0, %s82
    %s86 = sphi 0, %s85
    %s102 = sphi 0, %s86
    %s108 = sphi 0, %s110
    %s111 = sphi 0, %s108
    %s112 = sphi 0, %s111
    %s128 = sphi 0, %s112
    %s136 = sphi 0, %s138
    %s139 = sphi 0, %s136
    %s140 = sphi 0, %s139
    %s156 = sphi 0, %s140
    %s164 = sphi 0, %s166
    %s167 = sphi 0, %s164
    %s168 = sphi 0, %s167
    %s184 = sphi 0, %s168
    %s190 = sphi 0, %s192
    %s193 = sphi 0, %s190
    %s194 = sphi 0, %s193
    %s210 = sphi 0, %s194
  $region4: #{_lambda_.4} parent=0 // loop_header_branch
    %16 = sbr.rel (%p14) target = $region8
  $region5: #{_lambda_.4} parent=0 // loop_body
    %s18 = ssub.s32 %s13, 1
    %s19 = ssub.s32 %s13, 2
    %s26 = sadd.s32 1, %s21
    %p27 = scmp.ge.s32.totalorder %s26, 1
    %s28 = scalar_select %p27, 0, %s26
    %s29 = sadd.s32 1, %s20
    %s30 = scalar_select %p27, %s29, %s20
    %p31 = scmp.ge.s32.totalorder %s30, 2
    %s32 = scalar_select %p31, 0, %s30
    %s33 = ssub.s32 %s20, %s32
    %p34 = scmp.eq.s32.totalorder %s33, 0
    %s36 = sadd.s32 %s35, 1
    %s37 = scalar_select %p34, %s35, %s36
    %p40 = pneg %p34
    %p41 = scmp.eq.s32.totalorder %s13, 1
    %p42 = por %p40, %p41
    %p43 = scmp.ne.s32.totalorder %s35, %s38
    %p44 = scmp.eq.s32.totalorder %s13, 0
    %p45 = por %p43, %p44
    %p46 = scmp.ne.s32.totalorder %s35, %s38
    %p47 = scmp.eq.s32.totalorder %s18, 1
    %p48 = por %p46, %p47
    %p49 = scmp.ne.s32.totalorder %s38, %s39
    %p50 = scmp.eq.s32.totalorder %s18, 0
    %p51 = por %p49, %p50
    %p52 = scmp.ne.s32.totalorder %s38, %s39
    %p53 = scmp.eq.s32.totalorder %s19, 1
    %p54 = por %p52, %p53
    %p56 = scmp.ne.s32.totalorder %s39, %s55
    %p57 = scmp.eq.s32.totalorder %s19, 0
    %p58 = por %p56, %p57
    %s60 = sadd.s32 %s59, 1
    %p63 = scmp.eq.s32.totalorder %s13, 1
    %p64 = scmp.ne.s32.totalorder %s59, %s61
    %p65 = scmp.eq.s32.totalorder %s13, 0
    %p66 = por %p64, %p65
    %p67 = scmp.ne.s32.totalorder %s59, %s61
    %p68 = scmp.eq.s32.totalorder %s18, 1
    %p69 = por %p67, %p68
    %p70 = scmp.ne.s32.totalorder %s61, %s62
    %p71 = scmp.eq.s32.totalorder %s18, 0
    %p72 = por %p70, %p71
    %p73 = scmp.ne.s32.totalorder %s61, %s62
    %p74 = scmp.eq.s32.totalorder %s19, 1
    %p75 = por %p73, %p74
    %p77 = scmp.ne.s32.totalorder %s62, %s76
    %p78 = scmp.eq.s32.totalorder %s19, 0
    %p79 = por %p77, %p78
    %s80 = ssub.s32 %s20, %s32
    %p81 = scmp.eq.s32.totalorder %s80, 0
    %s83 = sadd.s32 %s82, 1
    %s84 = scalar_select %p81, %s82, %s83
    %p87 = pneg %p81
    %p88 = scmp.eq.s32.totalorder %s13, 1
    %p89 = por %p87, %p88
    %p90 = scmp.ne.s32.totalorder %s82, %s85
    %p91 = scmp.eq.s32.totalorder %s13, 0
    %p92 = por %p90, %p91
    %p93 = scmp.ne.s32.totalorder %s82, %s85
    %p94 = scmp.eq.s32.totalorder %s18, 1
    %p95 = por %p93, %p94
    %p96 = scmp.ne.s32.totalorder %s85, %s86
    %p97 = scmp.eq.s32.totalorder %s18, 0
    %p98 = por %p96, %p97
    %p99 = scmp.ne.s32.totalorder %s85, %s86
    %p100 = scmp.eq.s32.totalorder %s19, 1
    %p101 = por %p99, %p100
    %p103 = scmp.ne.s32.totalorder %s86, %s102
    %p104 = scmp.eq.s32.totalorder %s19, 0
    %p105 = por %p103, %p104
    %s106 = ssub.s32 %s21, %s28
    %p107 = scmp.eq.s32.totalorder %s106, 0
    %s109 = sadd.s32 %s108, 1
    %s110 = scalar_select %p107, %s108, %s109
    %p113 = pneg %p107
    %p114 = scmp.eq.s32.totalorder %s13, 1
    %p115 = por %p113, %p114
    %p116 = scmp.ne.s32.totalorder %s108, %s111
    %p117 = scmp.eq.s32.totalorder %s13, 0
    %p118 = por %p116, %p117
    %p119 = scmp.ne.s32.totalorder %s108, %s111
    %p120 = scmp.eq.s32.totalorder %s18, 1
    %p121 = por %p119, %p120
    %p122 = scmp.ne.s32.totalorder %s111, %s112
    %p123 = scmp.eq.s32.totalorder %s18, 0
    %p124 = por %p122, %p123
    %p125 = scmp.ne.s32.totalorder %s111, %s112
    %p126 = scmp.eq.s32.totalorder %s19, 1
    %p127 = por %p125, %p126
    %p129 = scmp.ne.s32.totalorder %s112, %s128
    %p130 = scmp.eq.s32.totalorder %s19, 0
    %p131 = por %p129, %p130
    %s132 = ssub.s32 %s20, %s32
    %s133 = ssub.s32 %s21, %s28
    %s134 = sor.u32 %s132, %s133
    %p135 = scmp.eq.s32.totalorder %s134, 0
    %s137 = sadd.s32 %s136, 1
    %s138 = scalar_select %p135, %s136, %s137
    %p141 = pneg %p135
    %p142 = scmp.eq.s32.totalorder %s13, 1
    %p143 = por %p141, %p142
    %p144 = scmp.ne.s32.totalorder %s136, %s139
    %p145 = scmp.eq.s32.totalorder %s13, 0
    %p146 = por %p144, %p145
    %p147 = scmp.ne.s32.totalorder %s136, %s139
    %p148 = scmp.eq.s32.totalorder %s18, 1
    %p149 = por %p147, %p148
    %p150 = scmp.ne.s32.totalorder %s139, %s140
    %p151 = scmp.eq.s32.totalorder %s18, 0
    %p152 = por %p150, %p151
    %p153 = scmp.ne.s32.totalorder %s139, %s140
    %p154 = scmp.eq.s32.totalorder %s19, 1
    %p155 = por %p153, %p154
    %p157 = scmp.ne.s32.totalorder %s140, %s156
    %p158 = scmp.eq.s32.totalorder %s19, 0
    %p159 = por %p157, %p158
    %s160 = ssub.s32 %s20, %s32
    %s161 = ssub.s32 %s21, %s28
    %s162 = sor.u32 %s160, %s161
    %p163 = scmp.eq.s32.totalorder %s162, 0
    %s165 = sadd.s32 %s164, 1
    %s166 = scalar_select %p163, %s164, %s165
    %p169 = pneg %p163
    %p170 = scmp.eq.s32.totalorder %s13, 1
    %p171 = por %p169, %p170
    %p172 = scmp.ne.s32.totalorder %s164, %s167
    %p173 = scmp.eq.s32.totalorder %s13, 0
    %p174 = por %p172, %p173
    %p175 = scmp.ne.s32.totalorder %s164, %s167
    %p176 = scmp.eq.s32.totalorder %s18, 1
    %p177 = por %p175, %p176
    %p178 = scmp.ne.s32.totalorder %s167, %s168
    %p179 = scmp.eq.s32.totalorder %s18, 0
    %p180 = por %p178, %p179
    %p181 = scmp.ne.s32.totalorder %s167, %s168
    %p182 = scmp.eq.s32.totalorder %s19, 1
    %p183 = por %p181, %p182
    %p185 = scmp.ne.s32.totalorder %s168, %s184
    %p186 = scmp.eq.s32.totalorder %s19, 0
    %p187 = por %p185, %p186
    %s188 = ssub.s32 %s20, %s32
    %p189 = scmp.eq.s32.totalorder %s188, 0
    %s191 = sadd.s32 %s190, 1
    %s192 = scalar_select %p189, %s190, %s191
    %p195 = pneg %p189
    %p196 = scmp.eq.s32.totalorder %s13, 1
    %p197 = por %p195, %p196
    %p198 = scmp.ne.s32.totalorder %s190, %s193
    %p199 = scmp.eq.s32.totalorder %s13, 0
    %p200 = por %p198, %p199
    %p201 = scmp.ne.s32.totalorder %s190, %s193
    %p202 = scmp.eq.s32.totalorder %s18, 1
    %p203 = por %p201, %p202
    %p204 = scmp.ne.s32.totalorder %s193, %s194
    %p205 = scmp.eq.s32.totalorder %s18, 0
    %p206 = por %p204, %p205
    %p207 = scmp.ne.s32.totalorder %s193, %s194
    %p208 = scmp.eq.s32.totalorder %s19, 1
    %p209 = por %p207, %p208
    %p211 = scmp.ne.s32.totalorder %s194, %s210
    %p212 = scmp.eq.s32.totalorder %s19, 0
    %p213 = por %p211, %p212
    %p214 = scmp.le.s32.totalorder 1, %s13
    %p215 = scmp.lt.s32.totalorder %s13, 3
    %p216 = pnand %p214, %p215
    %p217 = pneg %p216
    // Predicated region
    $region9: #{_lambda_.4} parent=5 // pred_check
      _
    $region10: #{_lambda_.4} parent=5 // pred_check_branch
      %219 = sbr.rel (%p216) target = $region12
    $region11: #{_lambda_.4} parent=5 // pred_region
      %s220 = ssub.s32 %s13, 1
      // Predicated region
      $region13: #{_lambda_.4} parent=11 // pred_check
        %p221 = pneg %p72
      $region14: #{_lambda_.4} parent=11 // pred_check_branch
        %223 = sbr.rel (%p221) target = $region16
      $region15: #{_lambda_.4} parent=11 // pred_region
        _
      $region16: #{_lambda_.4} parent=11 // pred_fallthru
        _
      // Predicated region
      $region17: #{_lambda_.4} parent=11 // pred_check
        %p224 = pneg %p124
      $region18: #{_lambda_.4} parent=11 // pred_check_branch
        %226 = sbr.rel (%p224) target = $region20
      $region19: #{_lambda_.4} parent=11 // pred_region
        %s227 = smul.u32 2, %s23
        %p228 = scmp.lt.s32.totalorder %s227, 1
        %s229 = scalar_select %p228, %s227, 1
        %s230 = scalar_lea.vmem %s3, %s229
        %s231 = smul.u32 2, %s23
      $region20: #{_lambda_.4} parent=11 // pred_fallthru
        _
    $region12: #{_lambda_.4} parent=5 // pred_fallthru
      _
    %p232 = scmp.lt.s32.totalorder %s13, 2
    // Predicated region
    $region21: #{_lambda_.4} parent=5 // pred_check
      %p233 = pneg %p232
    $region22: #{_lambda_.4} parent=5 // pred_check_branch
      %235 = sbr.rel (%p233) target = $region24
    $region23: #{_lambda_.4} parent=5 // pred_region
      // Predicated region
      $region25: #{_lambda_.4} parent=23 // pred_check
        %p236 = pneg %p45
      $region26: #{_lambda_.4} parent=23 // pred_check_branch
        %238 = sbr.rel (%p236) target = $region28
      $region27: #{_lambda_.4} parent=23 // pred_region
        %s239 = smul.u32 16, %s20
        %p240 = scmp.lt.s32.totalorder %s239, 31
        %s241 = scalar_select %p240, %s239, 31
        %s242 = smul.addr %s241, 4
        %s243 = scalar_lea.vmem %s0, %s242
        %s244 = smul.u32 16, %s20
      $region28: #{_lambda_.4} parent=23 // pred_fallthru
        _
      // Predicated region
      $region29: #{_lambda_.4} parent=23 // pred_check
        %p245 = pneg %p92
      $region30: #{_lambda_.4} parent=23 // pred_check_branch
        %247 = sbr.rel (%p245) target = $region32
      $region31: #{_lambda_.4} parent=23 // pred_region
        %s248 = smul.u32 16, %s20
        %p249 = scmp.lt.s32.totalorder %s248, 31
        %s250 = scalar_select %p249, %s248, 31
        %s251 = smul.addr %s250, 8
        %s252 = scalar_lea.vmem %s2, %s251
        %s253 = smul.u32 16, %s20
      $region32: #{_lambda_.4} parent=23 // pred_fallthru
        _
      // Predicated region
      $region33: #{_lambda_.4} parent=23 // pred_check
        %p254 = pneg %p146
      $region34: #{_lambda_.4} parent=23 // pred_check_branch
        %256 = sbr.rel (%p254) target = $region36
      $region35: #{_lambda_.4} parent=23 // pred_region
        %s257 = smul.u32 16, %s20
        %s258 = smul.u32 2, %s21
        %p259 = scmp.lt.s32.totalorder %s257, 31
        %s260 = scalar_select %p259, %s257, 31
        %p261 = scmp.lt.s32.totalorder %s258, 1
        %s262 = scalar_select %p261, %s258, 1
        %s263 = smul.addr %s260, 2
        %s264 = sadd.s32 %s262, %s263
        %s265 = smul.addr %s264, 4
        %s266 = scalar_lea.vmem %s4, %s265
        %s267 = smul.u32 16, %s20
        %s268 = smul.u32 2, %s21
      $region36: #{_lambda_.4} parent=23 // pred_fallthru
        _
    $region24: #{_lambda_.4} parent=5 // pred_fallthru
      _
    %p269 = scmp.le.s32.totalorder 1, %s13
    %p270 = scmp.lt.s32.totalorder %s13, 3
    %p271 = pnand %p269, %p270
    %p272 = pneg %p271
    // Predicated region
    $region37: #{_lambda_.4} parent=5 // pred_check
      _
    $region38: #{_lambda_.4} parent=5 // pred_check_branch
      %274 = sbr.rel (%p271) target = $region40
    $region39: #{_lambda_.4} parent=5 // pred_region
      %s275 = ssub.s32 %s13, 1
      %s276 = smul.u32 16, %s22
      %p277 = scmp.lt.s32.totalorder %s276, 31
      %s278 = scalar_select %p277, %s276, 31
      %s279 = smul.addr %s278, 4
      %s280 = scalar_lea.vmem %s0, %s279
      %p281 = pneg %p51
      %p282 = pneg %p48
      %p283 = pneg %p72
      %p284 = pneg %p69
      %s285 = smul.u32 16, %s22
      %p286 = scmp.lt.s32.totalorder %s285, 31
      %s287 = scalar_select %p286, %s285, 31
      %s288 = smul.addr %s287, 8
      %s289 = scalar_lea.vmem %s2, %s288
      %p290 = pneg %p98
      %p291 = pneg %p95
      %s292 = smul.u32 2, %s23
      %p293 = scmp.lt.s32.totalorder %s292, 1
      %s294 = scalar_select %p293, %s292, 1
      %s295 = scalar_lea.vmem %s3, %s294
      %p296 = pneg %p124
      %p297 = pneg %p121
      %s298 = smul.u32 16, %s22
      %s299 = smul.u32 2, %s23
      %p300 = scmp.lt.s32.totalorder %s298, 31
      %s301 = scalar_select %p300, %s298, 31
      %p302 = scmp.lt.s32.totalorder %s299, 1
      %s303 = scalar_select %p302, %s299, 1
      %s304 = smul.addr %s301, 2
      %s305 = sadd.s32 %s303, %s304
      %s306 = smul.addr %s305, 4
      %s307 = scalar_lea.vmem %s4, %s306
      %p308 = pneg %p152
      %p309 = pneg %p149
      %p310 = pneg %p180
      %p311 = pneg %p177
      %s312 = smul.u32 16, %s22
      %s313 = smul.u32 2, %s23
      %p314 = scmp.lt.s32.totalorder %s312, 31
      %s315 = scalar_select %p314, %s312, 31
      %p316 = scmp.lt.s32.totalorder %s313, 1
      %s317 = scalar_select %p316, %s313, 1
      %s318 = smul.addr %s315, 2
      %s319 = sadd.s32 %s317, %s318
      %s320 = smul.addr %s319, 4
      %s321 = scalar_lea.vmem %s5, %s320
      %p322 = pneg %p206
      %p323 = pneg %p203
      %s324 = smul.u32 16, %s22
      %p325 = scmp.lt.s32.totalorder %s324, 31
      %s326 = scalar_select %p325, %s324, 31
      %s327 = smul.addr %s326, 8
      %s328 = scalar_lea.vmem %s6, %s327
      %s329 = smul.u32 16, %s22
      %p330 = scmp.lt.s32.totalorder %s329, 31
      %s331 = scalar_select %p330, %s329, 31
      %s332 = smul.addr %s331, 4
      %s333 = scalar_lea.vmem %s0, %s332
      %s334 = smul.u32 16, %s22
      %s335 = smul.u32 16, %s22
      %p336 = scmp.lt.s32.totalorder %s335, 31
      %s337 = scalar_select %p336, %s335, 31
      %s338 = smul.addr %s337, 8
      %s339 = scalar_lea.vmem %s2, %s338
      %s340 = smul.u32 16, %s22
      %s341 = smul.u32 2, %s23
      %p342 = scmp.lt.s32.totalorder %s341, 1
      %s343 = scalar_select %p342, %s341, 1
      %s344 = scalar_lea.vmem %s3, %s343
      %s345 = smul.u32 2, %s23
      %s346 = smul.u32 16, %s22
      %s347 = smul.u32 2, %s23
      %p348 = scmp.lt.s32.totalorder %s346, 31
      %s349 = scalar_select %p348, %s346, 31
      %p350 = scmp.lt.s32.totalorder %s347, 1
      %s351 = scalar_select %p350, %s347, 1
      %s352 = smul.addr %s349, 2
      %s353 = sadd.s32 %s351, %s352
      %s354 = smul.addr %s353, 4
      %s355 = scalar_lea.vmem %s4, %s354
      %s356 = smul.u32 16, %s22
      %s357 = smul.u32 2, %s23
      %s358 = smul.u32 16, %s22
      %s359 = smul.u32 2, %s23
      %p360 = scmp.lt.s32.totalorder %s358, 31
      %s361 = scalar_select %p360, %s358, 31
      %p362 = scmp.lt.s32.totalorder %s359, 1
      %s363 = scalar_select %p362, %s359, 1
      %s364 = smul.addr %s361, 2
      %s365 = sadd.s32 %s363, %s364
      %s366 = smul.addr %s365, 4
      %s367 = scalar_lea.vmem %s5, %s366
      %s368 = smul.u32 16, %s22
      %s369 = smul.u32 2, %s23
      %s370 = smul.u32 16, %s22
      %p371 = scmp.lt.s32.totalorder %s370, 31
      %s372 = scalar_select %p371, %s370, 31
      %s373 = smul.addr %s372, 8
      %s374 = scalar_lea.vmem %s6, %s373
      %s375 = smul.u32 16, %s22
      %p377 = scmp.eq.s32.totalorder %s23, 0
      // Predicated region
      $region41: #{_lambda_.4} parent=39 // pred_check
        %p378 = pneg %p377
      $region42: #{_lambda_.4} parent=39 // pred_check_branch
        %380 = sbr.rel (%p378) target = $region44
      $region43: #{_lambda_.4} parent=39 // pred_region
        %381 = vst [vmem:[%s374] sm:$0xff] 0.0
        %382 = vst [vmem:[%s374 + $0x8] sm:$0xff] 0.0
        %383 = vst [vmem:[%s374 + $0x10] sm:$0xff] 0.0
        %384 = vst [vmem:[%s374 + $0x18] sm:$0xff] 0.0
        %385 = vst [vmem:[%s374 + $0x20] sm:$0xff] 0.0
        %386 = vst [vmem:[%s374 + $0x28] sm:$0xff] 0.0
        %387 = vst [vmem:[%s374 + $0x30] sm:$0xff] 0.0
        %388 = vst [vmem:[%s374 + $0x38] sm:$0xff] 0.0
        %389 = vst [vmem:[%s374 + $0x40] sm:$0xff] 0.0
        %390 = vst [vmem:[%s374 + $0x48] sm:$0xff] 0.0
        %391 = vst [vmem:[%s374 + $0x50] sm:$0xff] 0.0
        %392 = vst [vmem:[%s374 + $0x58] sm:$0xff] 0.0
        %393 = vst [vmem:[%s374 + $0x60] sm:$0xff] 0.0
        %394 = vst [vmem:[%s374 + $0x68] sm:$0xff] 0.0
        %395 = vst [vmem:[%s374 + $0x70] sm:$0xff] 0.0
        %396 = vst [vmem:[%s374 + $0x78] sm:$0xff] 0.0
      $region44: #{_lambda_.4} parent=39 // pred_fallthru
        _
      %s397 = smul.u32 %s23, 256
      %s398 = sshra.s32 %s397, 3
      %s399 = sand.u32 %s397, 7
      %s400 = smul.addr %s398, 4
      %s401 = scalar_lea.vmem %s1, %s400
      %v402 = vld [vmem:[%s401] sm:$0xf]
      %v403 = vld [vmem:[%s401 + $0x4] sm:$0xf]
      %v404 = vld [vmem:[%s401 + $0x8] sm:$0xf]
      %v405 = vld [vmem:[%s401 + $0xc] sm:$0xf]
      %v406 = vld [vmem:[%s401 + $0x10] sm:$0xf]
      %v407 = vld [vmem:[%s401 + $0x14] sm:$0xf]
      %v408 = vld [vmem:[%s401 + $0x18] sm:$0xf]
      %v409 = vld [vmem:[%s401 + $0x1c] sm:$0xf]
      %v410 = vld [vmem:[%s401 + $0x20] sm:$0xf]
      %v411 = vld [vmem:[%s401 + $0x24] sm:$0xf]
      %v412 = vld [vmem:[%s401 + $0x28] sm:$0xf]
      %v413 = vld [vmem:[%s401 + $0x2c] sm:$0xf]
      %v414 = vld [vmem:[%s401 + $0x30] sm:$0xf]
      %v415 = vld [vmem:[%s401 + $0x34] sm:$0xf]
      %v416 = vld [vmem:[%s401 + $0x38] sm:$0xf]
      %v417 = vld [vmem:[%s401 + $0x3c] sm:$0xf]
      %v418 = vld [vmem:[%s401 + $0x40] sm:$0xf]
      %v419 = vld [vmem:[%s401 + $0x44] sm:$0xf]
      %v420 = vld [vmem:[%s401 + $0x48] sm:$0xf]
      %v421 = vld [vmem:[%s401 + $0x4c] sm:$0xf]
      %v422 = vld [vmem:[%s401 + $0x50] sm:$0xf]
      %v423 = vld [vmem:[%s401 + $0x54] sm:$0xf]
      %v424 = vld [vmem:[%s401 + $0x58] sm:$0xf]
      %v425 = vld [vmem:[%s401 + $0x5c] sm:$0xf]
      %v426 = vld [vmem:[%s401 + $0x60] sm:$0xf]
      %v427 = vld [vmem:[%s401 + $0x64] sm:$0xf]
      %v428 = vld [vmem:[%s401 + $0x68] sm:$0xf]
      %v429 = vld [vmem:[%s401 + $0x6c] sm:$0xf]
      %v430 = vld [vmem:[%s401 + $0x70] sm:$0xf]
      %v431 = vld [vmem:[%s401 + $0x74] sm:$0xf]
      %v432 = vld [vmem:[%s401 + $0x78] sm:$0xf]
      %v433 = vld [vmem:[%s401 + $0x7c] sm:$0xf]
      %v434 = vld [vmem:[%s333] sm:$0xf]
      %v435 = vld [vmem:[%s333 + $0x4] sm:$0xf]
      %v436 = vld [vmem:[%s333 + $0x8] sm:$0xf]
      %v437 = vld [vmem:[%s333 + $0xc] sm:$0xf]
      %v438 = vld [vmem:[%s333 + $0x10] sm:$0xf]
      %v439 = vld [vmem:[%s333 + $0x14] sm:$0xf]
      %v440 = vld [vmem:[%s333 + $0x18] sm:$0xf]
      %v441 = vld [vmem:[%s333 + $0x1c] sm:$0xf]
      %v442 = vld [vmem:[%s333 + $0x20] sm:$0xf]
      %v443 = vld [vmem:[%s333 + $0x24] sm:$0xf]
      %v444 = vld [vmem:[%s333 + $0x28] sm:$0xf]
      %v445 = vld [vmem:[%s333 + $0x2c] sm:$0xf]
      %v446 = vld [vmem:[%s333 + $0x30] sm:$0xf]
      %v447 = vld [vmem:[%s333 + $0x34] sm:$0xf]
      %v448 = vld [vmem:[%s333 + $0x38] sm:$0xf]
      %v449 = vld [vmem:[%s333 + $0x3c] sm:$0xf]
      %v466 = vunpack.c.l.b16 %v434
      %v467 = vunpack.c.l.b16 %v435
      %v468 = vunpack.c.l.b16 %v436
      %v469 = vunpack.c.l.b16 %v437
      %v470 = vunpack.c.l.b16 %v438
      %v471 = vunpack.c.l.b16 %v439
      %v472 = vunpack.c.l.b16 %v440
      %v473 = vunpack.c.l.b16 %v441
      %v474 = vunpack.c.l.b16 %v442
      %v475 = vunpack.c.l.b16 %v443
      %v476 = vunpack.c.l.b16 %v444
      %v477 = vunpack.c.l.b16 %v445
      %v478 = vunpack.c.l.b16 %v446
      %v479 = vunpack.c.l.b16 %v447
      %v480 = vunpack.c.l.b16 %v448
      %v481 = vunpack.c.l.b16 %v449
      %v482 = vpack.c.b16 %v467, %v466
      %v483 = vpack.c.b16 %v469, %v468
      %v484 = vpack.c.b16 %v471, %v470
      %v485 = vpack.c.b16 %v473, %v472
      %v486 = vpack.c.b16 %v475, %v474
      %v487 = vpack.c.b16 %v477, %v476
      %v488 = vpack.c.b16 %v479, %v478
      %v489 = vpack.c.b16 %v481, %v480
      %v522 = vunpack.c.l.b16 %v402
      %v523 = vunpack.c.l.b16 %v403
      %v524 = vunpack.c.l.b16 %v404
      %v525 = vunpack.c.l.b16 %v405
      %v526 = vunpack.c.l.b16 %v406
      %v527 = vunpack.c.l.b16 %v407
      %v528 = vunpack.c.l.b16 %v408
      %v529 = vunpack.c.l.b16 %v409
      %v530 = vunpack.c.l.b16 %v410
      %v531 = vunpack.c.l.b16 %v411
      %v532 = vunpack.c.l.b16 %v412
      %v533 = vunpack.c.l.b16 %v413
      %v534 = vunpack.c.l.b16 %v414
      %v535 = vunpack.c.l.b16 %v415
      %v536 = vunpack.c.l.b16 %v416
      %v537 = vunpack.c.l.b16 %v417
      %v538 = vunpack.c.l.b16 %v418
      %v539 = vunpack.c.l.b16 %v419
      %v540 = vunpack.c.l.b16 %v420
      %v541 = vunpack.c.l.b16 %v421
      %v542 = vunpack.c.l.b16 %v422
      %v543 = vunpack.c.l.b16 %v423
      %v544 = vunpack.c.l.b16 %v424
      %v545 = vunpack.c.l.b16 %v425
      %v546 = vunpack.c.l.b16 %v426
      %v547 = vunpack.c.l.b16 %v427
      %v548 = vunpack.c.l.b16 %v428
      %v549 = vunpack.c.l.b16 %v429
      %v550 = vunpack.c.l.b16 %v430
      %v551 = vunpack.c.l.b16 %v431
      %v552 = vunpack.c.l.b16 %v432
      %v553 = vunpack.c.l.b16 %v433
      %v554 = vpack.c.b16 %v523, %v522
      %v555 = vpack.c.b16 %v525, %v524
      %v556 = vpack.c.b16 %v527, %v526
      %v557 = vpack.c.b16 %v529, %v528
      %v558 = vpack.c.b16 %v531, %v530
      %v559 = vpack.c.b16 %v533, %v532
      %v560 = vpack.c.b16 %v535, %v534
      %v561 = vpack.c.b16 %v537, %v536
      %v562 = vpack.c.b16 %v539, %v538
      %v563 = vpack.c.b16 %v541, %v540
      %v564 = vpack.c.b16 %v543, %v542
      %v565 = vpack.c.b16 %v545, %v544
      %v566 = vpack.c.b16 %v547, %v546
      %v567 = vpack.c.b16 %v549, %v548
      %v568 = vpack.c.b16 %v551, %v550
      %v569 = vpack.c.b16 %v553, %v552
      %vm570 = vcmask 261120
      %v572 = vsel %vm570, %v482, 0
      %v575 = vsel %vm570, %v483, 0
      %v578 = vsel %vm570, %v484, 0
      %v581 = vsel %vm570, %v485, 0
      %v584 = vsel %vm570, %v486, 0
      %v587 = vsel %vm570, %v487, 0
      %v590 = vsel %vm570, %v488, 0
      %v593 = vsel %vm570, %v489, 0
      %v596 = vsel %vm570, %v554, 0
      %v599 = vsel %vm570, %v555, 0
      %v602 = vsel %vm570, %v556, 0
      %v605 = vsel %vm570, %v557, 0
      %v608 = vsel %vm570, %v558, 0
      %v611 = vsel %vm570, %v559, 0
      %v614 = vsel %vm570, %v560, 0
      %v617 = vsel %vm570, %v561, 0
      %v620 = vsel %vm570, %v562, 0
      %v623 = vsel %vm570, %v563, 0
      %v626 = vsel %vm570, %v564, 0
      %v629 = vsel %vm570, %v565, 0
      %v632 = vsel %vm570, %v566, 0
      %v635 = vsel %vm570, %v567, 0
      %v638 = vsel %vm570, %v568, 0
      %v641 = vsel %vm570, %v569, 0
      %643 = vmatprep.subr.bf16.mxu0 0
      %644 = vmatpush1.bf16.xpose.msra.mxu0 %v596
      %645 = vmatprep.subr.bf16.mxu0 0
      %646 = vmatpush1.bf16.xpose.msra.mxu0 %v599
      %647 = vmatprep.subr.bf16.mxu0 0
      %648 = vmatpush1.bf16.xpose.msra.mxu0 %v602
      %649 = vmatprep.subr.bf16.mxu0 0
      %650 = vmatpush1.bf16.xpose.msra.mxu0 %v605
      %651 = vmatprep.subr.bf16.mxu0 0
      %652 = vmatpush1.bf16.xpose.msra.mxu0 %v608
      %653 = vmatprep.subr.bf16.mxu0 0
      %654 = vmatpush1.bf16.xpose.msra.mxu0 %v611
      %655 = vmatprep.subr.bf16.mxu0 0
      %656 = vmatpush1.bf16.xpose.msra.mxu0 %v614
      %657 = vmatprep.subr.bf16.mxu0 0
      %658 = vmatpush1.bf16.xpose.msra.mxu0 %v617
      %659 = vmatprep.subr.bf16.mxu0 0
      %660 = vmatpush1.bf16.xpose.msra.mxu0 %v620
      %661 = vmatprep.subr.bf16.mxu0 0
      %662 = vmatpush1.bf16.xpose.msra.mxu0 %v623
      %663 = vmatprep.subr.bf16.mxu0 0
      %664 = vmatpush1.bf16.xpose.msra.mxu0 %v626
      %665 = vmatprep.subr.bf16.mxu0 0
      %666 = vmatpush1.bf16.xpose.msra.mxu0 %v629
      %667 = vmatprep.subr.bf16.mxu0 0
      %668 = vmatpush1.bf16.xpose.msra.mxu0 %v632
      %669 = vmatprep.subr.bf16.mxu0 0
      %670 = vmatpush1.bf16.xpose.msra.mxu0 %v635
      %671 = vmatprep.subr.bf16.mxu0 0
      %672 = vmatpush1.bf16.xpose.msra.mxu0 %v638
      %673 = vmatprep.subr.bf16.mxu0 0
      %674 = vmatpush1.bf16.xpose.msra.mxu0 %v641
      %675 = vmatprep.mubr.bf16.mxu0 0
      %676 = vmatmul.mubr.bf16.gmra.mrb[0].mxu0 %v572
      %v677 = vpop.f32.mrb[0].mxu0
      %v678 = vadd.f32 0.0, %v677
      %v679 = vpop.f32.mrb[0].mxu0
      %v680 = vadd.f32 0.0, %v679
      %v681 = vpop.f32.mrb[0].mxu0
      %v682 = vadd.f32 0.0, %v681
      %v683 = vpop.f32.mrb[0].mxu0
      %v684 = vadd.f32 0.0, %v683
      %685 = vmatprep.mubr.bf16.mxu0 0
      %686 = vmatmul.mubr.bf16.gmra.mrb[0].mxu0 %v575
      %v687 = vpop.f32.mrb[0].mxu0
      %v688 = vadd.f32 0.0, %v687
      %v689 = vpop.f32.mrb[0].mxu0
      %v690 = vadd.f32 0.0, %v689
      %v691 = vpop.f32.mrb[0].mxu0
      %v692 = vadd.f32 0.0, %v691
      %v693 = vpop.f32.mrb[0].mxu0
      %v694 = vadd.f32 0.0, %v693
      %695 = vmatprep.mubr.bf16.mxu0 0
      %696 = vmatmul.mubr.bf16.gmra.mrb[0].mxu0 %v578
      %v697 = vpop.f32.mrb[0].mxu0
      %v698 = vadd.f32 0.0, %v697
      %v699 = vpop.f32.mrb[0].mxu0
      %v700 = vadd.f32 0.0, %v699
      %v701 = vpop.f32.mrb[0].mxu0
      %v702 = vadd.f32 0.0, %v701
      %v703 = vpop.f32.mrb[0].mxu0
      %v704 = vadd.f32 0.0, %v703
      %705 = vmatprep.mubr.bf16.mxu0 0
      %706 = vmatmul.mubr.bf16.gmra.mrb[0].mxu0 %v581
      %v707 = vpop.f32.mrb[0].mxu0
      %v708 = vadd.f32 0.0, %v707
      %v709 = vpop.f32.mrb[0].mxu0
      %v710 = vadd.f32 0.0, %v709
      %v711 = vpop.f32.mrb[0].mxu0
      %v712 = vadd.f32 0.0, %v711
      %v713 = vpop.f32.mrb[0].mxu0
      %v714 = vadd.f32 0.0, %v713
      %715 = vmatprep.mubr.bf16.mxu0 0
      %716 = vmatmul.mubr.bf16.gmra.mrb[0].mxu0 %v584
      %v717 = vpop.f32.mrb[0].mxu0
      %v718 = vadd.f32 0.0, %v717
      %v719 = vpop.f32.mrb[0].mxu0
      %v720 = vadd.f32 0.0, %v719
      %v721 = vpop.f32.mrb[0].mxu0
      %v722 = vadd.f32 0.0, %v721
      %v723 = vpop.f32.mrb[0].mxu0
      %v724 = vadd.f32 0.0, %v723
      %725 = vmatprep.mubr.bf16.mxu0 0
      %726 = vmatmul.mubr.bf16.gmra.mrb[0].mxu0 %v587
      %v727 = vpop.f32.mrb[0].mxu0
      %v728 = vadd.f32 0.0, %v727
      %v729 = vpop.f32.mrb[0].mxu0
      %v730 = vadd.f32 0.0, %v729
      %v731 = vpop.f32.mrb[0].mxu0
      %v732 = vadd.f32 0.0, %v731
      %v733 = vpop.f32.mrb[0].mxu0
      %v734 = vadd.f32 0.0, %v733
      %735 = vmatprep.mubr.bf16.mxu0 0
      %736 = vmatmul.mubr.bf16.gmra.mrb[0].mxu0 %v590
      %v737 = vpop.f32.mrb[0].mxu0
      %v738 = vadd.f32 0.0, %v737
      %v739 = vpop.f32.mrb[0].mxu0
      %v740 = vadd.f32 0.0, %v739
      %v741 = vpop.f32.mrb[0].mxu0
      %v742 = vadd.f32 0.0, %v741
      %v743 = vpop.f32.mrb[0].mxu0
      %v744 = vadd.f32 0.0, %v743
      %745 = vmatprep.mubr.bf16.mxu0 0
      %746 = vmatmul.mubr.bf16.gmra.mrb[0].mxu0 %v593
      %v747 = vpop.f32.mrb[0].mxu0
      %v748 = vadd.f32 0.0, %v747
      %v749 = vpop.f32.mrb[0].mxu0
      %v750 = vadd.f32 0.0, %v749
      %v751 = vpop.f32.mrb[0].mxu0
      %v752 = vadd.f32 0.0, %v751
      %v753 = vpop.f32.mrb[0].mxu0
      %v754 = vadd.f32 0.0, %v753
      %755 = vdwg.mxu0
      %v756 = vld [vmem:[%s339] sm:$0xff]
      %v757 = vld [vmem:[%s339 + $0x8] sm:$0xff]
      %v758 = vld [vmem:[%s339 + $0x10] sm:$0xff]
      %v759 = vld [vmem:[%s339 + $0x18] sm:$0xff]
      %v760 = vld [vmem:[%s339 + $0x20] sm:$0xff]
      %v761 = vld [vmem:[%s339 + $0x28] sm:$0xff]
      %v762 = vld [vmem:[%s339 + $0x30] sm:$0xff]
      %v763 = vld [vmem:[%s339 + $0x38] sm:$0xff]
      %v764 = vld [vmem:[%s339 + $0x40] sm:$0xff]
      %v765 = vld [vmem:[%s339 + $0x48] sm:$0xff]
      %v766 = vld [vmem:[%s339 + $0x50] sm:$0xff]
      %v767 = vld [vmem:[%s339 + $0x58] sm:$0xff]
      %v768 = vld [vmem:[%s339 + $0x60] sm:$0xff]
      %v769 = vld [vmem:[%s339 + $0x68] sm:$0xff]
      %v770 = vld [vmem:[%s339 + $0x70] sm:$0xff]
      %v771 = vld [vmem:[%s339 + $0x78] sm:$0xff]
      %v772 = vld [vmem:[%s344] sm:$0x3]
      %774 = vset.pattern.permute.xlu0 0
      %775 = vperm.xlu0 %774, %v756
      %v776 = vpop.permute.xlu0 %775
      %779 = vset.pattern.permute.xlu0 0
      %780 = vperm.xlu0 %779, %v757
      %v781 = vpop.permute.xlu0 %780
      %784 = vset.pattern.permute.xlu0 0
      %785 = vperm.xlu0 %784, %v758
      %v786 = vpop.permute.xlu0 %785
      %789 = vset.pattern.permute.xlu0 0
      %790 = vperm.xlu0 %789, %v759
      %v791 = vpop.permute.xlu0 %790
      %794 = vset.pattern.permute.xlu0 0
      %795 = vperm.xlu0 %794, %v760
      %v796 = vpop.permute.xlu0 %795
      %799 = vset.pattern.permute.xlu0 0
      %800 = vperm.xlu0 %799, %v761
      %v801 = vpop.permute.xlu0 %800
      %804 = vset.pattern.permute.xlu0 0
      %805 = vperm.xlu0 %804, %v762
      %v806 = vpop.permute.xlu0 %805
      %809 = vset.pattern.permute.xlu0 0
      %810 = vperm.xlu0 %809, %v763
      %v811 = vpop.permute.xlu0 %810
      %814 = vset.pattern.permute.xlu0 0
      %815 = vperm.xlu0 %814, %v764
      %v816 = vpop.permute.xlu0 %815
      %819 = vset.pattern.permute.xlu0 0
      %820 = vperm.xlu0 %819, %v765
      %v821 = vpop.permute.xlu0 %820
      %824 = vset.pattern.permute.xlu0 0
      %825 = vperm.xlu0 %824, %v766
      %v826 = vpop.permute.xlu0 %825
      %829 = vset.pattern.permute.xlu0 0
      %830 = vperm.xlu0 %829, %v767
      %v831 = vpop.permute.xlu0 %830
      %834 = vset.pattern.permute.xlu0 0
      %835 = vperm.xlu0 %834, %v768
      %v836 = vpop.permute.xlu0 %835
      %839 = vset.pattern.permute.xlu0 0
      %840 = vperm.xlu0 %839, %v769
      %v841 = vpop.permute.xlu0 %840
      %844 = vset.pattern.permute.xlu0 0
      %845 = vperm.xlu0 %844, %v770
      %v846 = vpop.permute.xlu0 %845
      %849 = vset.pattern.permute.xlu0 0
      %850 = vperm.xlu0 %849, %v771
      %v851 = vpop.permute.xlu0 %850
      %v854 = vlaneseq
      %v855 = vshrl.u32 %v854, 7
      %v856 = vsub.s32 0, %v855
      %v857 = vrot.slane %v772, %v856
      %v858 = vlaneseq
      %v859 = vshrl.u32 %v858, 7
      %v860 = vsub.s32 1, %v859
      %v861 = vrot.slane %v772, %v860
      %v864 = vadd.f32 %v776, %v857
      %v865 = vadd.f32 %v776, %v861
      %v866 = vadd.f32 %v781, %v857
      %v867 = vadd.f32 %v781, %v861
      %v868 = vadd.f32 %v786, %v857
      %v869 = vadd.f32 %v786, %v861
      %v870 = vadd.f32 %v791, %v857
      %v871 = vadd.f32 %v791, %v861
      %v872 = vadd.f32 %v796, %v857
      %v873 = vadd.f32 %v796, %v861
      %v874 = vadd.f32 %v801, %v857
      %v875 = vadd.f32 %v801, %v861
      %v876 = vadd.f32 %v806, %v857
      %v877 = vadd.f32 %v806, %v861
      %v878 = vadd.f32 %v811, %v857
      %v879 = vadd.f32 %v811, %v861
      %v880 = vadd.f32 %v816, %v857
      %v881 = vadd.f32 %v816, %v861
      %v882 = vadd.f32 %v821, %v857
      %v883 = vadd.f32 %v821, %v861
      %v884 = vadd.f32 %v826, %v857
      %v885 = vadd.f32 %v826, %v861
      %v886 = vadd.f32 %v831, %v857
      %v887 = vadd.f32 %v831, %v861
      %v888 = vadd.f32 %v836, %v857
      %v889 = vadd.f32 %v836, %v861
      %v890 = vadd.f32 %v841, %v857
      %v891 = vadd.f32 %v841, %v861
      %v892 = vadd.f32 %v846, %v857
      %v893 = vadd.f32 %v846, %v861
      %v894 = vadd.f32 %v851, %v857
      %v895 = vadd.f32 %v851, %v861
      %v896 = vmul.f32 %v678, 2.0
      %v897 = vmul.f32 %v680, 2.0
      %v898 = vmul.f32 %v682, 2.0
      %v899 = vmul.f32 %v684, 2.0
      %v900 = vmul.f32 %v688, 2.0
      %v901 = vmul.f32 %v690, 2.0
      %v902 = vmul.f32 %v692, 2.0
      %v903 = vmul.f32 %v694, 2.0
      %v904 = vmul.f32 %v698, 2.0
      %v905 = vmul.f32 %v700, 2.0
      %v906 = vmul.f32 %v702, 2.0
      %v907 = vmul.f32 %v704, 2.0
      %v908 = vmul.f32 %v708, 2.0
      %v909 = vmul.f32 %v710, 2.0
      %v910 = vmul.f32 %v712, 2.0
      %v911 = vmul.f32 %v714, 2.0
      %v912 = vmul.f32 %v718, 2.0
      %v913 = vmul.f32 %v720, 2.0
      %v914 = vmul.f32 %v722, 2.0
      %v915 = vmul.f32 %v724, 2.0
      %v916 = vmul.f32 %v728, 2.0
      %v917 = vmul.f32 %v730, 2.0
      %v918 = vmul.f32 %v732, 2.0
      %v919 = vmul.f32 %v734, 2.0
      %v920 = vmul.f32 %v738, 2.0
      %v921 = vmul.f32 %v740, 2.0
      %v922 = vmul.f32 %v742, 2.0
      %v923 = vmul.f32 %v744, 2.0
      %v924 = vmul.f32 %v748, 2.0
      %v925 = vmul.f32 %v750, 2.0
      %v926 = vmul.f32 %v752, 2.0
      %v927 = vmul.f32 %v754, 2.0
      %v928 = vsub.f32 %v864, %v896
      %v929 = vsub.f32 %v865, %v897
      %v930 = vsub.f32 %v866, %v898
      %v931 = vsub.f32 %v867, %v899
      %v932 = vsub.f32 %v868, %v900
      %v933 = vsub.f32 %v869, %v901
      %v934 = vsub.f32 %v870, %v902
      %v935 = vsub.f32 %v871, %v903
      %v936 = vsub.f32 %v872, %v904
      %v937 = vsub.f32 %v873, %v905
      %v938 = vsub.f32 %v874, %v906
      %v939 = vsub.f32 %v875, %v907
      %v940 = vsub.f32 %v876, %v908
      %v941 = vsub.f32 %v877, %v909
      %v942 = vsub.f32 %v878, %v910
      %v943 = vsub.f32 %v879, %v911
      %v944 = vsub.f32 %v880, %v912
      %v945 = vsub.f32 %v881, %v913
      %v946 = vsub.f32 %v882, %v914
      %v947 = vsub.f32 %v883, %v915
      %v948 = vsub.f32 %v884, %v916
      %v949 = vsub.f32 %v885, %v917
      %v950 = vsub.f32 %v886, %v918
      %v951 = vsub.f32 %v887, %v919
      %v952 = vsub.f32 %v888, %v920
      %v953 = vsub.f32 %v889, %v921
      %v954 = vsub.f32 %v890, %v922
      %v955 = vsub.f32 %v891, %v923
      %v956 = vsub.f32 %v892, %v924
      %v957 = vsub.f32 %v893, %v925
      %v958 = vsub.f32 %v894, %v926
      %v959 = vsub.f32 %v895, %v927
      %v960 = vmax.f32 %v928, 0.0
      %v961 = vmax.f32 %v929, 0.0
      %v962 = vmax.f32 %v930, 0.0
      %v963 = vmax.f32 %v931, 0.0
      %v964 = vmax.f32 %v932, 0.0
      %v965 = vmax.f32 %v933, 0.0
      %v966 = vmax.f32 %v934, 0.0
      %v967 = vmax.f32 %v935, 0.0
      %v968 = vmax.f32 %v936, 0.0
      %v969 = vmax.f32 %v937, 0.0
      %v970 = vmax.f32 %v938, 0.0
      %v971 = vmax.f32 %v939, 0.0
      %v972 = vmax.f32 %v940, 0.0
      %v973 = vmax.f32 %v941, 0.0
      %v974 = vmax.f32 %v942, 0.0
      %v975 = vmax.f32 %v943, 0.0
      %v976 = vmax.f32 %v944, 0.0
      %v977 = vmax.f32 %v945, 0.0
      %v978 = vmax.f32 %v946, 0.0
      %v979 = vmax.f32 %v947, 0.0
      %v980 = vmax.f32 %v948, 0.0
      %v981 = vmax.f32 %v949, 0.0
      %v982 = vmax.f32 %v950, 0.0
      %v983 = vmax.f32 %v951, 0.0
      %v984 = vmax.f32 %v952, 0.0
      %v985 = vmax.f32 %v953, 0.0
      %v986 = vmax.f32 %v954, 0.0
      %v987 = vmax.f32 %v955, 0.0
      %v988 = vmax.f32 %v956, 0.0
      %v989 = vmax.f32 %v957, 0.0
      %v990 = vmax.f32 %v958, 0.0
      %v991 = vmax.f32 %v959, 0.0
      %v992 = vmax.f32 %v960, 0.25
      %v993 = vmax.f32 %v961, 0.25
      %v994 = vmax.f32 %v962, 0.25
      %v995 = vmax.f32 %v963, 0.25
      %v996 = vmax.f32 %v964, 0.25
      %v997 = vmax.f32 %v965, 0.25
      %v998 = vmax.f32 %v966, 0.25
      %v999 = vmax.f32 %v967, 0.25
      %v1000 = vmax.f32 %v968, 0.25
      %v1001 = vmax.f32 %v969, 0.25
      %v1002 = vmax.f32 %v970, 0.25
      %v1003 = vmax.f32 %v971, 0.25
      %v1004 = vmax.f32 %v972, 0.25
      %v1005 = vmax.f32 %v973, 0.25
      %v1006 = vmax.f32 %v974, 0.25
      %v1007 = vmax.f32 %v975, 0.25
      %v1008 = vmax.f32 %v976, 0.25
      %v1009 = vmax.f32 %v977, 0.25
      %v1010 = vmax.f32 %v978, 0.25
      %v1011 = vmax.f32 %v979, 0.25
      %v1012 = vmax.f32 %v980, 0.25
      %v1013 = vmax.f32 %v981, 0.25
      %v1014 = vmax.f32 %v982, 0.25
      %v1015 = vmax.f32 %v983, 0.25
      %v1016 = vmax.f32 %v984, 0.25
      %v1017 = vmax.f32 %v985, 0.25
      %v1018 = vmax.f32 %v986, 0.25
      %v1019 = vmax.f32 %v987, 0.25
      %v1020 = vmax.f32 %v988, 0.25
      %v1021 = vmax.f32 %v989, 0.25
      %v1022 = vmax.f32 %v990, 0.25
      %v1023 = vmax.f32 %v991, 0.25
      %v1024 = vrsqrt.pop %v992
      %v1025 = vrsqrt.pop %v993
      %v1026 = vrsqrt.pop %v994
      %v1027 = vrsqrt.pop %v995
      %v1028 = vrsqrt.pop %v996
      %v1029 = vrsqrt.pop %v997
      %v1030 = vrsqrt.pop %v998
      %v1031 = vrsqrt.pop %v999
      %v1032 = vrsqrt.pop %v1000
      %v1033 = vrsqrt.pop %v1001
      %v1034 = vrsqrt.pop %v1002
      %v1035 = vrsqrt.pop %v1003
      %v1036 = vrsqrt.pop %v1004
      %v1037 = vrsqrt.pop %v1005
      %v1038 = vrsqrt.pop %v1006
      %v1039 = vrsqrt.pop %v1007
      %v1040 = vrsqrt.pop %v1008
      %v1041 = vrsqrt.pop %v1009
      %v1042 = vrsqrt.pop %v1010
      %v1043 = vrsqrt.pop %v1011
      %v1044 = vrsqrt.pop %v1012
      %v1045 = vrsqrt.pop %v1013
      %v1046 = vrsqrt.pop %v1014
      %v1047 = vrsqrt.pop %v1015
      %v1048 = vrsqrt.pop %v1016
      %v1049 = vrsqrt.pop %v1017
      %v1050 = vrsqrt.pop %v1018
      %v1051 = vrsqrt.pop %v1019
      %v1052 = vrsqrt.pop %v1020
      %v1053 = vrsqrt.pop %v1021
      %v1054 = vrsqrt.pop %v1022
      %v1055 = vrsqrt.pop %v1023
      %vm1056 = vcmp.gt.f32.partialorder %v960, 4.0
      %vm1057 = vcmp.gt.f32.partialorder %v961, 4.0
      %vm1058 = vcmp.gt.f32.partialorder %v962, 4.0
      %vm1059 = vcmp.gt.f32.partialorder %v963, 4.0
      %vm1060 = vcmp.gt.f32.partialorder %v964, 4.0
      %vm1061 = vcmp.gt.f32.partialorder %v965, 4.0
      %vm1062 = vcmp.gt.f32.partialorder %v966, 4.0
      %vm1063 = vcmp.gt.f32.partialorder %v967, 4.0
      %vm1064 = vcmp.gt.f32.partialorder %v968, 4.0
      %vm1065 = vcmp.gt.f32.partialorder %v969, 4.0
      %vm1066 = vcmp.gt.f32.partialorder %v970, 4.0
      %vm1067 = vcmp.gt.f32.partialorder %v971, 4.0
      %vm1068 = vcmp.gt.f32.partialorder %v972, 4.0
      %vm1069 = vcmp.gt.f32.partialorder %v973, 4.0
      %vm1070 = vcmp.gt.f32.partialorder %v974, 4.0
      %vm1071 = vcmp.gt.f32.partialorder %v975, 4.0
      %vm1072 = vcmp.gt.f32.partialorder %v976, 4.0
      %vm1073 = vcmp.gt.f32.partialorder %v977, 4.0
      %vm1074 = vcmp.gt.f32.partialorder %v978, 4.0
      %vm1075 = vcmp.gt.f32.partialorder %v979, 4.0
      %vm1076 = vcmp.gt.f32.partialorder %v980, 4.0
      %vm1077 = vcmp.gt.f32.partialorder %v981, 4.0
      %vm1078 = vcmp.gt.f32.partialorder %v982, 4.0
      %vm1079 = vcmp.gt.f32.partialorder %v983, 4.0
      %vm1080 = vcmp.gt.f32.partialorder %v984, 4.0
      %vm1081 = vcmp.gt.f32.partialorder %v985, 4.0
      %vm1082 = vcmp.gt.f32.partialorder %v986, 4.0
      %vm1083 = vcmp.gt.f32.partialorder %v987, 4.0
      %vm1084 = vcmp.gt.f32.partialorder %v988, 4.0
      %vm1085 = vcmp.gt.f32.partialorder %v989, 4.0
      %vm1086 = vcmp.gt.f32.partialorder %v990, 4.0
      %vm1087 = vcmp.gt.f32.partialorder %v991, 4.0
      %v1088 = vsel %vm1056, 0.0, %v1024
      %v1089 = vsel %vm1057, 0.0, %v1025
      %v1090 = vsel %vm1058, 0.0, %v1026
      %v1091 = vsel %vm1059, 0.0, %v1027
      %v1092 = vsel %vm1060, 0.0, %v1028
      %v1093 = vsel %vm1061, 0.0, %v1029
      %v1094 = vsel %vm1062, 0.0, %v1030
      %v1095 = vsel %vm1063, 0.0, %v1031
      %v1096 = vsel %vm1064, 0.0, %v1032
      %v1097 = vsel %vm1065, 0.0, %v1033
      %v1098 = vsel %vm1066, 0.0, %v1034
      %v1099 = vsel %vm1067, 0.0, %v1035
      %v1100 = vsel %vm1068, 0.0, %v1036
      %v1101 = vsel %vm1069, 0.0, %v1037
      %v1102 = vsel %vm1070, 0.0, %v1038
      %v1103 = vsel %vm1071, 0.0, %v1039
      %v1104 = vsel %vm1072, 0.0, %v1040
      %v1105 = vsel %vm1073, 0.0, %v1041
      %v1106 = vsel %vm1074, 0.0, %v1042
      %v1107 = vsel %vm1075, 0.0, %v1043
      %v1108 = vsel %vm1076, 0.0, %v1044
      %v1109 = vsel %vm1077, 0.0, %v1045
      %v1110 = vsel %vm1078, 0.0, %v1046
      %v1111 = vsel %vm1079, 0.0, %v1047
      %v1112 = vsel %vm1080, 0.0, %v1048
      %v1113 = vsel %vm1081, 0.0, %v1049
      %v1114 = vsel %vm1082, 0.0, %v1050
      %v1115 = vsel %vm1083, 0.0, %v1051
      %v1116 = vsel %vm1084, 0.0, %v1052
      %v1117 = vsel %vm1085, 0.0, %v1053
      %v1118 = vsel %vm1086, 0.0, %v1054
      %v1119 = vsel %vm1087, 0.0, %v1055
      %v1120 = vld [vmem:[%s355] sm:$0xff]
      %v1121 = vld [vmem:[%s355 + $0x8] sm:$0xff]
      %v1122 = vld [vmem:[%s355 + $0x10] sm:$0xff]
      %v1123 = vld [vmem:[%s355 + $0x18] sm:$0xff]
      %v1124 = vld [vmem:[%s355 + $0x20] sm:$0xff]
      %v1125 = vld [vmem:[%s355 + $0x28] sm:$0xff]
      %v1126 = vld [vmem:[%s355 + $0x30] sm:$0xff]
      %v1127 = vld [vmem:[%s355 + $0x38] sm:$0xff]
      %v1128 = vld [vmem:[%s355 + $0x40] sm:$0xff]
      %v1129 = vld [vmem:[%s355 + $0x48] sm:$0xff]
      %v1130 = vld [vmem:[%s355 + $0x50] sm:$0xff]
      %v1131 = vld [vmem:[%s355 + $0x58] sm:$0xff]
      %v1132 = vld [vmem:[%s355 + $0x60] sm:$0xff]
      %v1133 = vld [vmem:[%s355 + $0x68] sm:$0xff]
      %v1134 = vld [vmem:[%s355 + $0x70] sm:$0xff]
      %v1135 = vld [vmem:[%s355 + $0x78] sm:$0xff]
      %v1136 = vunpack.c.l.bf16 %v1120
      %v1137 = vunpack.c.h.bf16 %v1120
      %v1138 = vunpack.c.l.bf16 %v1121
      %v1139 = vunpack.c.h.bf16 %v1121
      %v1140 = vunpack.c.l.bf16 %v1122
      %v1141 = vunpack.c.h.bf16 %v1122
      %v1142 = vunpack.c.l.bf16 %v1123
      %v1143 = vunpack.c.h.bf16 %v1123
      %v1144 = vunpack.c.l.bf16 %v1124
      %v1145 = vunpack.c.h.bf16 %v1124
      %v1146 = vunpack.c.l.bf16 %v1125
      %v1147 = vunpack.c.h.bf16 %v1125
      %v1148 = vunpack.c.l.bf16 %v1126
      %v1149 = vunpack.c.h.bf16 %v1126
      %v1150 = vunpack.c.l.bf16 %v1127
      %v1151 = vunpack.c.h.bf16 %v1127
      %v1152 = vunpack.c.l.bf16 %v1128
      %v1153 = vunpack.c.h.bf16 %v1128
      %v1154 = vunpack.c.l.bf16 %v1129
      %v1155 = vunpack.c.h.bf16 %v1129
      %v1156 = vunpack.c.l.bf16 %v1130
      %v1157 = vunpack.c.h.bf16 %v1130
      %v1158 = vunpack.c.l.bf16 %v1131
      %v1159 = vunpack.c.h.bf16 %v1131
      %v1160 = vunpack.c.l.bf16 %v1132
      %v1161 = vunpack.c.h.bf16 %v1132
      %v1162 = vunpack.c.l.bf16 %v1133
      %v1163 = vunpack.c.h.bf16 %v1133
      %v1164 = vunpack.c.l.bf16 %v1134
      %v1165 = vunpack.c.h.bf16 %v1134
      %v1166 = vunpack.c.l.bf16 %v1135
      %v1167 = vunpack.c.h.bf16 %v1135
      %v1168 = vmul.f32 %v1088, %v1136
      %v1169 = vmul.f32 %v1089, %v1137
      %v1170 = vmul.f32 %v1090, %v1138
      %v1171 = vmul.f32 %v1091, %v1139
      %v1172 = vmul.f32 %v1092, %v1140
      %v1173 = vmul.f32 %v1093, %v1141
      %v1174 = vmul.f32 %v1094, %v1142
      %v1175 = vmul.f32 %v1095, %v1143
      %v1176 = vmul.f32 %v1096, %v1144
      %v1177 = vmul.f32 %v1097, %v1145
      %v1178 = vmul.f32 %v1098, %v1146
      %v1179 = vmul.f32 %v1099, %v1147
      %v1180 = vmul.f32 %v1100, %v1148
      %v1181 = vmul.f32 %v1101, %v1149
      %v1182 = vmul.f32 %v1102, %v1150
      %v1183 = vmul.f32 %v1103, %v1151
      %v1184 = vmul.f32 %v1104, %v1152
      %v1185 = vmul.f32 %v1105, %v1153
      %v1186 = vmul.f32 %v1106, %v1154
      %v1187 = vmul.f32 %v1107, %v1155
      %v1188 = vmul.f32 %v1108, %v1156
      %v1189 = vmul.f32 %v1109, %v1157
      %v1190 = vmul.f32 %v1110, %v1158
      %v1191 = vmul.f32 %v1111, %v1159
      %v1192 = vmul.f32 %v1112, %v1160
      %v1193 = vmul.f32 %v1113, %v1161
      %v1194 = vmul.f32 %v1114, %v1162
      %v1195 = vmul.f32 %v1115, %v1163
      %v1196 = vmul.f32 %v1116, %v1164
      %v1197 = vmul.f32 %v1117, %v1165
      %v1198 = vmul.f32 %v1118, %v1166
      %v1199 = vmul.f32 %v1119, %v1167
      %v1200 = vpack.c.bf16 %v1170, %v1168
      %v1201 = vpack.c.bf16 %v1171, %v1169
      %v1202 = vpack.c.bf16 %v1174, %v1172
      %v1203 = vpack.c.bf16 %v1175, %v1173
      %v1204 = vpack.c.bf16 %v1178, %v1176
      %v1205 = vpack.c.bf16 %v1179, %v1177
      %v1206 = vpack.c.bf16 %v1182, %v1180
      %v1207 = vpack.c.bf16 %v1183, %v1181
      %v1208 = vpack.c.bf16 %v1186, %v1184
      %v1209 = vpack.c.bf16 %v1187, %v1185
      %v1210 = vpack.c.bf16 %v1190, %v1188
      %v1211 = vpack.c.bf16 %v1191, %v1189
      %v1212 = vpack.c.bf16 %v1194, %v1192
      %v1213 = vpack.c.bf16 %v1195, %v1193
      %v1214 = vpack.c.bf16 %v1198, %v1196
      %v1215 = vpack.c.bf16 %v1199, %v1197
      %v1232 = vunpack.c.l.b16 %v1200
      %v1233 = vunpack.c.l.b16 %v1201
      %v1234 = vunpack.c.h.b16 %v1200
      %v1235 = vunpack.c.h.b16 %v1201
      %v1236 = vunpack.c.l.b16 %v1202
      %v1237 = vunpack.c.l.b16 %v1203
      %v1238 = vunpack.c.h.b16 %v1202
      %v1239 = vunpack.c.h.b16 %v1203
      %v1240 = vunpack.c.l.b16 %v1204
      %v1241 = vunpack.c.l.b16 %v1205
      %v1242 = vunpack.c.h.b16 %v1204
      %v1243 = vunpack.c.h.b16 %v1205
      %v1244 = vunpack.c.l.b16 %v1206
      %v1245 = vunpack.c.l.b16 %v1207
      %v1246 = vunpack.c.h.b16 %v1206
      %v1247 = vunpack.c.h.b16 %v1207
      %v1248 = vunpack.c.l.b16 %v1208
      %v1249 = vunpack.c.l.b16 %v1209
      %v1250 = vunpack.c.h.b16 %v1208
      %v1251 = vunpack.c.h.b16 %v1209
      %v1252 = vunpack.c.l.b16 %v1210
      %v1253 = vunpack.c.l.b16 %v1211
      %v1254 = vunpack.c.h.b16 %v1210
      %v1255 = vunpack.c.h.b16 %v1211
      %v1256 = vunpack.c.l.b16 %v1212
      %v1257 = vunpack.c.l.b16 %v1213
      %v1258 = vunpack.c.h.b16 %v1212
      %v1259 = vunpack.c.h.b16 %v1213
      %v1260 = vunpack.c.l.b16 %v1214
      %v1261 = vunpack.c.l.b16 %v1215
      %v1262 = vunpack.c.h.b16 %v1214
      %v1263 = vunpack.c.h.b16 %v1215
      %v1264 = vpack.c.b16 %v1233, %v1232
      %v1265 = vpack.c.b16 %v1235, %v1234
      %v1266 = vpack.c.b16 %v1237, %v1236
      %v1267 = vpack.c.b16 %v1239, %v1238
      %v1268 = vpack.c.b16 %v1241, %v1240
      %v1269 = vpack.c.b16 %v1243, %v1242
      %v1270 = vpack.c.b16 %v1245, %v1244
      %v1271 = vpack.c.b16 %v1247, %v1246
      %v1272 = vpack.c.b16 %v1249, %v1248
      %v1273 = vpack.c.b16 %v1251, %v1250
      %v1274 = vpack.c.b16 %v1253, %v1252
      %v1275 = vpack.c.b16 %v1255, %v1254
      %v1276 = vpack.c.b16 %v1257, %v1256
      %v1277 = vpack.c.b16 %v1259, %v1258
      %v1278 = vpack.c.b16 %v1261, %v1260
      %v1279 = vpack.c.b16 %v1263, %v1262
      %1296 = vst [vmem:[%s367] sm:$0xff] %v1264
      %1297 = vst [vmem:[%s367 + $0x8] sm:$0xff] %v1265
      %1298 = vst [vmem:[%s367 + $0x10] sm:$0xff] %v1266
      %1299 = vst [vmem:[%s367 + $0x18] sm:$0xff] %v1267
      %1300 = vst [vmem:[%s367 + $0x20] sm:$0xff] %v1268
      %1301 = vst [vmem:[%s367 + $0x28] sm:$0xff] %v1269
      %1302 = vst [vmem:[%s367 + $0x30] sm:$0xff] %v1270
      %1303 = vst [vmem:[%s367 + $0x38] sm:$0xff] %v1271
      %1304 = vst [vmem:[%s367 + $0x40] sm:$0xff] %v1272
      %1305 = vst [vmem:[%s367 + $0x48] sm:$0xff] %v1273
      %1306 = vst [vmem:[%s367 + $0x50] sm:$0xff] %v1274
      %1307 = vst [vmem:[%s367 + $0x58] sm:$0xff] %v1275
      %1308 = vst [vmem:[%s367 + $0x60] sm:$0xff] %v1276
      %1309 = vst [vmem:[%s367 + $0x68] sm:$0xff] %v1277
      %1310 = vst [vmem:[%s367 + $0x70] sm:$0xff] %v1278
      %1311 = vst [vmem:[%s367 + $0x78] sm:$0xff] %v1279
      %v1312 = vld [vmem:[%s374] sm:$0xff]
      %v1313 = vld [vmem:[%s374 + $0x8] sm:$0xff]
      %v1314 = vld [vmem:[%s374 + $0x10] sm:$0xff]
      %v1315 = vld [vmem:[%s374 + $0x18] sm:$0xff]
      %v1316 = vld [vmem:[%s374 + $0x20] sm:$0xff]
      %v1317 = vld [vmem:[%s374 + $0x28] sm:$0xff]
      %v1318 = vld [vmem:[%s374 + $0x30] sm:$0xff]
      %v1319 = vld [vmem:[%s374 + $0x38] sm:$0xff]
      %v1320 = vld [vmem:[%s374 + $0x40] sm:$0xff]
      %v1321 = vld [vmem:[%s374 + $0x48] sm:$0xff]
      %v1322 = vld [vmem:[%s374 + $0x50] sm:$0xff]
      %v1323 = vld [vmem:[%s374 + $0x58] sm:$0xff]
      %v1324 = vld [vmem:[%s374 + $0x60] sm:$0xff]
      %v1325 = vld [vmem:[%s374 + $0x68] sm:$0xff]
      %v1326 = vld [vmem:[%s374 + $0x70] sm:$0xff]
      %v1327 = vld [vmem:[%s374 + $0x78] sm:$0xff]
      %v1328 = vadd.f32 %v1168, %v1169
      %1329 = vadd.xlane.f32.xlu0 %v1328
      %v1330 = vpop.xlane.xlu0 %1329
      %v1331 = vadd.f32 %v1170, %v1171
      %1332 = vadd.xlane.f32.xlu0 %v1331
      %v1333 = vpop.xlane.xlu0 %1332
      %v1334 = vadd.f32 %v1172, %v1173
      %1335 = vadd.xlane.f32.xlu0 %v1334
      %v1336 = vpop.xlane.xlu0 %1335
      %v1337 = vadd.f32 %v1174, %v1175
      %1338 = vadd.xlane.f32.xlu0 %v1337
      %v1339 = vpop.xlane.xlu0 %1338
      %v1340 = vadd.f32 %v1176, %v1177
      %1341 = vadd.xlane.f32.xlu0 %v1340
      %v1342 = vpop.xlane.xlu0 %1341
      %v1343 = vadd.f32 %v1178, %v1179
      %1344 = vadd.xlane.f32.xlu0 %v1343
      %v1345 = vpop.xlane.xlu0 %1344
      %v1346 = vadd.f32 %v1180, %v1181
      %1347 = vadd.xlane.f32.xlu0 %v1346
      %v1348 = vpop.xlane.xlu0 %1347
      %v1349 = vadd.f32 %v1182, %v1183
      %1350 = vadd.xlane.f32.xlu0 %v1349
      %v1351 = vpop.xlane.xlu0 %1350
      %v1352 = vadd.f32 %v1184, %v1185
      %1353 = vadd.xlane.f32.xlu0 %v1352
      %v1354 = vpop.xlane.xlu0 %1353
      %v1355 = vadd.f32 %v1186, %v1187
      %1356 = vadd.xlane.f32.xlu0 %v1355
      %v1357 = vpop.xlane.xlu0 %1356
      %v1358 = vadd.f32 %v1188, %v1189
      %1359 = vadd.xlane.f32.xlu0 %v1358
      %v1360 = vpop.xlane.xlu0 %1359
      %v1361 = vadd.f32 %v1190, %v1191
      %1362 = vadd.xlane.f32.xlu0 %v1361
      %v1363 = vpop.xlane.xlu0 %1362
      %v1364 = vadd.f32 %v1192, %v1193
      %1365 = vadd.xlane.f32.xlu0 %v1364
      %v1366 = vpop.xlane.xlu0 %1365
      %v1367 = vadd.f32 %v1194, %v1195
      %1368 = vadd.xlane.f32.xlu0 %v1367
      %v1369 = vpop.xlane.xlu0 %1368
      %v1370 = vadd.f32 %v1196, %v1197
      %1371 = vadd.xlane.f32.xlu0 %v1370
      %v1372 = vpop.xlane.xlu0 %1371
      %v1373 = vadd.f32 %v1198, %v1199
      %1374 = vadd.xlane.f32.xlu0 %v1373
      %v1375 = vpop.xlane.xlu0 %1374
      %v1376 = vadd.f32 %v1312, %v1330
      %v1377 = vadd.f32 %v1313, %v1333
      %v1378 = vadd.f32 %v1314, %v1336
      %v1379 = vadd.f32 %v1315, %v1339
      %v1380 = vadd.f32 %v1316, %v1342
      %v1381 = vadd.f32 %v1317, %v1345
      %v1382 = vadd.f32 %v1318, %v1348
      %v1383 = vadd.f32 %v1319, %v1351
      %v1384 = vadd.f32 %v1320, %v1354
      %v1385 = vadd.f32 %v1321, %v1357
      %v1386 = vadd.f32 %v1322, %v1360
      %v1387 = vadd.f32 %v1323, %v1363
      %v1388 = vadd.f32 %v1324, %v1366
      %v1389 = vadd.f32 %v1325, %v1369
      %v1390 = vadd.f32 %v1326, %v1372
      %v1391 = vadd.f32 %v1327, %v1375
      %1392 = vst [vmem:[%s374] sm:$0xff] %v1376
      %1393 = vst [vmem:[%s374 + $0x8] sm:$0xff] %v1377
      %1394 = vst [vmem:[%s374 + $0x10] sm:$0xff] %v1378
      %1395 = vst [vmem:[%s374 + $0x18] sm:$0xff] %v1379
      %1396 = vst [vmem:[%s374 + $0x20] sm:$0xff] %v1380
      %1397 = vst [vmem:[%s374 + $0x28] sm:$0xff] %v1381
      %1398 = vst [vmem:[%s374 + $0x30] sm:$0xff] %v1382
      %1399 = vst [vmem:[%s374 + $0x38] sm:$0xff] %v1383
      %1400 = vst [vmem:[%s374 + $0x40] sm:$0xff] %v1384
      %1401 = vst [vmem:[%s374 + $0x48] sm:$0xff] %v1385
      %1402 = vst [vmem:[%s374 + $0x50] sm:$0xff] %v1386
      %1403 = vst [vmem:[%s374 + $0x58] sm:$0xff] %v1387
      %1404 = vst [vmem:[%s374 + $0x60] sm:$0xff] %v1388
      %1405 = vst [vmem:[%s374 + $0x68] sm:$0xff] %v1389
      %1406 = vst [vmem:[%s374 + $0x70] sm:$0xff] %v1390
      %1407 = vst [vmem:[%s374 + $0x78] sm:$0xff] %v1391
      %s1408 = smul.u32 16, %s22
      %s1409 = smul.u32 2, %s23
      %p1410 = scmp.lt.s32.totalorder %s1408, 31
      %s1411 = scalar_select %p1410, %s1408, 31
      %p1412 = scmp.lt.s32.totalorder %s1409, 1
      %s1413 = scalar_select %p1412, %s1409, 1
      %s1414 = smul.addr %s1411, 2
      %s1415 = sadd.s32 %s1413, %s1414
      %s1416 = smul.addr %s1415, 4
      %s1417 = scalar_lea.vmem %s5, %s1416
      %s1418 = smul.u32 16, %s22
      %p1419 = scmp.lt.s32.totalorder %s1418, 31
      %s1420 = scalar_select %p1419, %s1418, 31
      %s1421 = smul.addr %s1420, 8
      %s1422 = scalar_lea.vmem %s6, %s1421
      // Predicated region
      $region45: #{_lambda_.4} parent=39 // pred_check
        %p1423 = pneg %p177
      $region46: #{_lambda_.4} parent=39 // pred_check_branch
        %1425 = sbr.rel (%p1423) target = $region48
      $region47: #{_lambda_.4} parent=39 // pred_region
        %s1426 = smul.u32 16, %s22
        %s1427 = smul.u32 2, %s23
      $region48: #{_lambda_.4} parent=39 // pred_fallthru
        _
      // Predicated region
      $region49: #{_lambda_.4} parent=39 // pred_check
        %p1428 = pneg %p203
      $region50: #{_lambda_.4} parent=39 // pred_check_branch
        %1430 = sbr.rel (%p1428) target = $region52
      $region51: #{_lambda_.4} parent=39 // pred_region
        %s1431 = smul.u32 16, %s22
      $region52: #{_lambda_.4} parent=39 // pred_fallthru
        _
    $region40: #{_lambda_.4} parent=5 // pred_fallthru
      _
    %p1432 = scmp.le.s32.totalorder 2, %s13
    // Predicated region
    $region53: #{_lambda_.4} parent=5 // pred_check
      %p1433 = pneg %p1432
    $region54: #{_lambda_.4} parent=5 // pred_check_branch
      %1435 = sbr.rel (%p1433) target = $region56
    $region55: #{_lambda_.4} parent=5 // pred_region
      %s1436 = ssub.s32 %s13, 2
      // Predicated region
      $region57: #{_lambda_.4} parent=55 // pred_check
        %p1437 = pneg %p183
      $region58: #{_lambda_.4} parent=55 // pred_check_branch
        %1439 = sbr.rel (%p1437) target = $region60
      $region59: #{_lambda_.4} parent=55 // pred_region
        %s1440 = smul.u32 16, %s24
        %s1441 = smul.u32 2, %s25
        %p1442 = scmp.lt.s32.totalorder %s1440, 31
        %s1443 = scalar_select %p1442, %s1440, 31
        %p1444 = scmp.lt.s32.totalorder %s1441, 1
        %s1445 = scalar_select %p1444, %s1441, 1
        %s1446 = smul.addr %s1443, 2
        %s1447 = sadd.s32 %s1445, %s1446
        %s1448 = smul.addr %s1447, 4
        %s1449 = scalar_lea.vmem %s5, %s1448
      $region60: #{_lambda_.4} parent=55 // pred_fallthru
        _
      // Predicated region
      $region61: #{_lambda_.4} parent=55 // pred_check
        %p1450 = pneg %p209
      $region62: #{_lambda_.4} parent=55 // pred_check_branch
        %1452 = sbr.rel (%p1450) target = $region64
      $region63: #{_lambda_.4} parent=55 // pred_region
        %s1453 = smul.u32 16, %s24
        %p1454 = scmp.lt.s32.totalorder %s1453, 31
        %s1455 = scalar_select %p1454, %s1453, 31
        %s1456 = smul.addr %s1455, 8
        %s1457 = scalar_lea.vmem %s6, %s1456
      $region64: #{_lambda_.4} parent=55 // pred_fallthru
        _
    $region56: #{_lambda_.4} parent=5 // pred_fallthru
      _
  $region6: #{_lambda_.4} parent=0 // loop_footer
    %s17 = sadd.s32 1, %s13
  $region7: #{_lambda_.4} parent=0 // loop_footer_branch
    %12 = sbr.rel target = $region3
  $region8: #{_lambda_.4} parent=0 // loop_exit
    _

// kernel: _lambda_.5
$region0: #{_lambda_.5}
  #allocation0 [shape = 'u32[]', space=smem, size = 0x4, offset = 0x4, fixed_abs, tag = 'smem constant byte address 0x4 - core index']
  #allocation1 [shape = 'u32[144,128]{1,0:T(1,128)}', space=vmem, size = 0x12000, scoped, tag = 'internal scratch']
  %s0 = inlined_call_operand.vmem [shape: bf16[256,256], index: 0, kind: input, shape index: {}]
  %s1 = inlined_call_operand.vmem [shape: f32[256,1], index: 1, kind: input, shape index: {}]
  %s2 = inlined_call_operand.vmem [shape: f32[256,32], index: 2, kind: input, shape index: {}]
  %s3 = inlined_call_operand.vmem [shape: f32[256,32], index: 3, kind: input, shape index: {}]
  %s4 = inlined_call_operand.vmem [shape: f32[256,32], index: 4, kind: output, shape index: {}]
  %s5 = sld [smem:[#allocation0]]
  $region26: #{_lambda_.5} parent=0
    _
  %s7 = ssub.s32 1, %s5
  %s8 = scalar_select 0, %s7, %s5
  // Predicated region
  $region2: #{_lambda_.5} parent=0 // pred_check
    _
  $region3: #{_lambda_.5} parent=0 // pred_check_branch
    %10 = sbr.rel (0) target = $region5
  $region4: #{_lambda_.5} parent=0 // pred_region
    _
  $region5: #{_lambda_.5} parent=0 // pred_fallthru
    _
  // Predicated region
  $region6: #{_lambda_.5} parent=0 // pred_check
    _
  $region7: #{_lambda_.5} parent=0 // pred_check_branch
    %12 = sbr.rel (0) target = $region9
  $region8: #{_lambda_.5} parent=0 // pred_region
    _
  $region9: #{_lambda_.5} parent=0 // pred_fallthru
    _
  // Predicated region
  $region10: #{_lambda_.5} parent=0 // pred_check
    _
  $region11: #{_lambda_.5} parent=0 // pred_check_branch
    %14 = sbr.rel (0) target = $region13
  $region12: #{_lambda_.5} parent=0 // pred_region
    _
  $region13: #{_lambda_.5} parent=0 // pred_fallthru
    _
  // Predicated region
  $region14: #{_lambda_.5} parent=0 // pred_check
    _
  $region15: #{_lambda_.5} parent=0 // pred_check_branch
    %16 = sbr.rel (0) target = $region17
  $region16: #{_lambda_.5} parent=0 // pred_region
    _
  $region17: #{_lambda_.5} parent=0 // pred_fallthru
    _
  %v18 = vld [vmem:[%s3] sm:$0xff]
  %v19 = vld [vmem:[%s3 + $0x8] sm:$0xff]
  %v20 = vld [vmem:[%s3 + $0x10] sm:$0xff]
  %v21 = vld [vmem:[%s3 + $0x18] sm:$0xff]
  %v22 = vld [vmem:[%s3 + $0x20] sm:$0xff]
  %v23 = vld [vmem:[%s3 + $0x28] sm:$0xff]
  %v24 = vld [vmem:[%s3 + $0x30] sm:$0xff]
  %v25 = vld [vmem:[%s3 + $0x38] sm:$0xff]
  %v26 = vld [vmem:[%s3 + $0x40] sm:$0xff]
  %v27 = vld [vmem:[%s3 + $0x48] sm:$0xff]
  %v28 = vld [vmem:[%s3 + $0x50] sm:$0xff]
  %v29 = vld [vmem:[%s3 + $0x58] sm:$0xff]
  %v30 = vld [vmem:[%s3 + $0x60] sm:$0xff]
  %v31 = vld [vmem:[%s3 + $0x68] sm:$0xff]
  %v32 = vld [vmem:[%s3 + $0x70] sm:$0xff]
  %v33 = vld [vmem:[%s3 + $0x78] sm:$0xff]
  %v34 = vld [vmem:[%s3 + $0x80] sm:$0xff]
  %v35 = vld [vmem:[%s3 + $0x88] sm:$0xff]
  %v36 = vld [vmem:[%s3 + $0x90] sm:$0xff]
  %v37 = vld [vmem:[%s3 + $0x98] sm:$0xff]
  %v38 = vld [vmem:[%s3 + $0xa0] sm:$0xff]
  %v39 = vld [vmem:[%s3 + $0xa8] sm:$0xff]
  %v40 = vld [vmem:[%s3 + $0xb0] sm:$0xff]
  %v41 = vld [vmem:[%s3 + $0xb8] sm:$0xff]
  %v42 = vld [vmem:[%s3 + $0xc0] sm:$0xff]
  %v43 = vld [vmem:[%s3 + $0xc8] sm:$0xff]
  %v44 = vld [vmem:[%s3 + $0xd0] sm:$0xff]
  %v45 = vld [vmem:[%s3 + $0xd8] sm:$0xff]
  %v46 = vld [vmem:[%s3 + $0xe0] sm:$0xff]
  %v47 = vld [vmem:[%s3 + $0xe8] sm:$0xff]
  %v48 = vld [vmem:[%s3 + $0xf0] sm:$0xff]
  %v49 = vld [vmem:[%s3 + $0xf8] sm:$0xff]
  %v50 = vld [vmem:[%s1] sm:$0xff]
  %v51 = vld [vmem:[%s1 + $0x8] sm:$0xff]
  %v52 = vld [vmem:[%s1 + $0x10] sm:$0xff]
  %v53 = vld [vmem:[%s1 + $0x18] sm:$0xff]
  %v54 = vld [vmem:[%s1 + $0x20] sm:$0xff]
  %v55 = vld [vmem:[%s1 + $0x28] sm:$0xff]
  %v56 = vld [vmem:[%s1 + $0x30] sm:$0xff]
  %v57 = vld [vmem:[%s1 + $0x38] sm:$0xff]
  %v58 = vld [vmem:[%s1 + $0x40] sm:$0xff]
  %v59 = vld [vmem:[%s1 + $0x48] sm:$0xff]
  %v60 = vld [vmem:[%s1 + $0x50] sm:$0xff]
  %v61 = vld [vmem:[%s1 + $0x58] sm:$0xff]
  %v62 = vld [vmem:[%s1 + $0x60] sm:$0xff]
  %v63 = vld [vmem:[%s1 + $0x68] sm:$0xff]
  %v64 = vld [vmem:[%s1 + $0x70] sm:$0xff]
  %v65 = vld [vmem:[%s1 + $0x78] sm:$0xff]
  %v66 = vld [vmem:[%s1 + $0x80] sm:$0xff]
  %v67 = vld [vmem:[%s1 + $0x88] sm:$0xff]
  %v68 = vld [vmem:[%s1 + $0x90] sm:$0xff]
  %v69 = vld [vmem:[%s1 + $0x98] sm:$0xff]
  %v70 = vld [vmem:[%s1 + $0xa0] sm:$0xff]
  %v71 = vld [vmem:[%s1 + $0xa8] sm:$0xff]
  %v72 = vld [vmem:[%s1 + $0xb0] sm:$0xff]
  %v73 = vld [vmem:[%s1 + $0xb8] sm:$0xff]
  %v74 = vld [vmem:[%s1 + $0xc0] sm:$0xff]
  %v75 = vld [vmem:[%s1 + $0xc8] sm:$0xff]
  %v76 = vld [vmem:[%s1 + $0xd0] sm:$0xff]
  %v77 = vld [vmem:[%s1 + $0xd8] sm:$0xff]
  %v78 = vld [vmem:[%s1 + $0xe0] sm:$0xff]
  %v79 = vld [vmem:[%s1 + $0xe8] sm:$0xff]
  %v80 = vld [vmem:[%s1 + $0xf0] sm:$0xff]
  %v81 = vld [vmem:[%s1 + $0xf8] sm:$0xff]
  %83 = vset.pattern.permute.xlu0 0
  %84 = vperm.xlu0 %83, %v50
  %v85 = vpop.permute.xlu0 %84
  %88 = vset.pattern.permute.xlu0 0
  %89 = vperm.xlu0 %88, %v51
  %v90 = vpop.permute.xlu0 %89
  %93 = vset.pattern.permute.xlu0 0
  %94 = vperm.xlu0 %93, %v52
  %v95 = vpop.permute.xlu0 %94
  %98 = vset.pattern.permute.xlu0 0
  %99 = vperm.xlu0 %98, %v53
  %v100 = vpop.permute.xlu0 %99
  %103 = vset.pattern.permute.xlu0 0
  %104 = vperm.xlu0 %103, %v54
  %v105 = vpop.permute.xlu0 %104
  %108 = vset.pattern.permute.xlu0 0
  %109 = vperm.xlu0 %108, %v55
  %v110 = vpop.permute.xlu0 %109
  %113 = vset.pattern.permute.xlu0 0
  %114 = vperm.xlu0 %113, %v56
  %v115 = vpop.permute.xlu0 %114
  %118 = vset.pattern.permute.xlu0 0
  %119 = vperm.xlu0 %118, %v57
  %v120 = vpop.permute.xlu0 %119
  %123 = vset.pattern.permute.xlu0 0
  %124 = vperm.xlu0 %123, %v58
  %v125 = vpop.permute.xlu0 %124
  %128 = vset.pattern.permute.xlu0 0
  %129 = vperm.xlu0 %128, %v59
  %v130 = vpop.permute.xlu0 %129
  %133 = vset.pattern.permute.xlu0 0
  %134 = vperm.xlu0 %133, %v60
  %v135 = vpop.permute.xlu0 %134
  %138 = vset.pattern.permute.xlu0 0
  %139 = vperm.xlu0 %138, %v61
  %v140 = vpop.permute.xlu0 %139
  %143 = vset.pattern.permute.xlu0 0
  %144 = vperm.xlu0 %143, %v62
  %v145 = vpop.permute.xlu0 %144
  %148 = vset.pattern.permute.xlu0 0
  %149 = vperm.xlu0 %148, %v63
  %v150 = vpop.permute.xlu0 %149
  %153 = vset.pattern.permute.xlu0 0
  %154 = vperm.xlu0 %153, %v64
  %v155 = vpop.permute.xlu0 %154
  %158 = vset.pattern.permute.xlu0 0
  %159 = vperm.xlu0 %158, %v65
  %v160 = vpop.permute.xlu0 %159
  %163 = vset.pattern.permute.xlu0 0
  %164 = vperm.xlu0 %163, %v66
  %v165 = vpop.permute.xlu0 %164
  %168 = vset.pattern.permute.xlu0 0
  %169 = vperm.xlu0 %168, %v67
  %v170 = vpop.permute.xlu0 %169
  %173 = vset.pattern.permute.xlu0 0
  %174 = vperm.xlu0 %173, %v68
  %v175 = vpop.permute.xlu0 %174
  %178 = vset.pattern.permute.xlu0 0
  %179 = vperm.xlu0 %178, %v69
  %v180 = vpop.permute.xlu0 %179
  %183 = vset.pattern.permute.xlu0 0
  %184 = vperm.xlu0 %183, %v70
  %v185 = vpop.permute.xlu0 %184
  %188 = vset.pattern.permute.xlu0 0
  %189 = vperm.xlu0 %188, %v71
  %v190 = vpop.permute.xlu0 %189
  %193 = vset.pattern.permute.xlu0 0
  %194 = vperm.xlu0 %193, %v72
  %v195 = vpop.permute.xlu0 %194
  %198 = vset.pattern.permute.xlu0 0
  %199 = vperm.xlu0 %198, %v73
  %v200 = vpop.permute.xlu0 %199
  %203 = vset.pattern.permute.xlu0 0
  %204 = vperm.xlu0 %203, %v74
  %v205 = vpop.permute.xlu0 %204
  %208 = vset.pattern.permute.xlu0 0
  %209 = vperm.xlu0 %208, %v75
  %v210 = vpop.permute.xlu0 %209
  %213 = vset.pattern.permute.xlu0 0
  %214 = vperm.xlu0 %213, %v76
  %v215 = vpop.permute.xlu0 %214
  %218 = vset.pattern.permute.xlu0 0
  %219 = vperm.xlu0 %218, %v77
  %v220 = vpop.permute.xlu0 %219
  %223 = vset.pattern.permute.xlu0 0
  %224 = vperm.xlu0 %223, %v78
  %v225 = vpop.permute.xlu0 %224
  %228 = vset.pattern.permute.xlu0 0
  %229 = vperm.xlu0 %228, %v79
  %v230 = vpop.permute.xlu0 %229
  %233 = vset.pattern.permute.xlu0 0
  %234 = vperm.xlu0 %233, %v80
  %v235 = vpop.permute.xlu0 %234
  %238 = vset.pattern.permute.xlu0 0
  %239 = vperm.xlu0 %238, %v81
  %v240 = vpop.permute.xlu0 %239
  %v242 = vmul.f32 %v85, %v18
  %v243 = vmul.f32 %v90, %v19
  %v244 = vmul.f32 %v95, %v20
  %v245 = vmul.f32 %v100, %v21
  %v246 = vmul.f32 %v105, %v22
  %v247 = vmul.f32 %v110, %v23
  %v248 = vmul.f32 %v115, %v24
  %v249 = vmul.f32 %v120, %v25
  %v250 = vmul.f32 %v125, %v26
  %v251 = vmul.f32 %v130, %v27
  %v252 = vmul.f32 %v135, %v28
  %v253 = vmul.f32 %v140, %v29
  %v254 = vmul.f32 %v145, %v30
  %v255 = vmul.f32 %v150, %v31
  %v256 = vmul.f32 %v155, %v32
  %v257 = vmul.f32 %v160, %v33
  %v258 = vmul.f32 %v165, %v34
  %v259 = vmul.f32 %v170, %v35
  %v260 = vmul.f32 %v175, %v36
  %v261 = vmul.f32 %v180, %v37
  %v262 = vmul.f32 %v185, %v38
  %v263 = vmul.f32 %v190, %v39
  %v264 = vmul.f32 %v195, %v40
  %v265 = vmul.f32 %v200, %v41
  %v266 = vmul.f32 %v205, %v42
  %v267 = vmul.f32 %v210, %v43
  %v268 = vmul.f32 %v215, %v44
  %v269 = vmul.f32 %v220, %v45
  %v270 = vmul.f32 %v225, %v46
  %v271 = vmul.f32 %v230, %v47
  %v272 = vmul.f32 %v235, %v48
  %v273 = vmul.f32 %v240, %v49
  %v274 = vpack.c.bf16 %v243, %v242
  %v275 = vpack.c.bf16 %v245, %v244
  %v276 = vpack.c.bf16 %v247, %v246
  %v277 = vpack.c.bf16 %v249, %v248
  %v278 = vpack.c.bf16 %v251, %v250
  %v279 = vpack.c.bf16 %v253, %v252
  %v280 = vpack.c.bf16 %v255, %v254
  %v281 = vpack.c.bf16 %v257, %v256
  %v282 = vpack.c.bf16 %v259, %v258
  %v283 = vpack.c.bf16 %v261, %v260
  %v284 = vpack.c.bf16 %v263, %v262
  %v285 = vpack.c.bf16 %v265, %v264
  %v286 = vpack.c.bf16 %v267, %v266
  %v287 = vpack.c.bf16 %v269, %v268
  %v288 = vpack.c.bf16 %v271, %v270
  %v289 = vpack.c.bf16 %v273, %v272
  %v290 = vld [vmem:[%s0] sm:$0xff]
  %v291 = vld [vmem:[%s0 + $0x8] sm:$0xff]
  %v292 = vld [vmem:[%s0 + $0x10] sm:$0xff]
  %v293 = vld [vmem:[%s0 + $0x18] sm:$0xff]
  %v294 = vld [vmem:[%s0 + $0x20] sm:$0xff]
  %v295 = vld [vmem:[%s0 + $0x28] sm:$0xff]
  %v296 = vld [vmem:[%s0 + $0x30] sm:$0xff]
  %v297 = vld [vmem:[%s0 + $0x38] sm:$0xff]
  %v298 = vld [vmem:[%s0 + $0x40] sm:$0xff]
  %v299 = vld [vmem:[%s0 + $0x48] sm:$0xff]
  %v300 = vld [vmem:[%s0 + $0x50] sm:$0xff]
  %v301 = vld [vmem:[%s0 + $0x58] sm:$0xff]
  %v302 = vld [vmem:[%s0 + $0x60] sm:$0xff]
  %v303 = vld [vmem:[%s0 + $0x68] sm:$0xff]
  %v304 = vld [vmem:[%s0 + $0x70] sm:$0xff]
  %v305 = vld [vmem:[%s0 + $0x78] sm:$0xff]
  %v306 = vld [vmem:[%s0 + $0x80] sm:$0xff]
  %v307 = vld [vmem:[%s0 + $0x88] sm:$0xff]
  %v308 = vld [vmem:[%s0 + $0x90] sm:$0xff]
  %v309 = vld [vmem:[%s0 + $0x98] sm:$0xff]
  %v310 = vld [vmem:[%s0 + $0xa0] sm:$0xff]
  %v311 = vld [vmem:[%s0 + $0xa8] sm:$0xff]
  %v312 = vld [vmem:[%s0 + $0xb0] sm:$0xff]
  %v313 = vld [vmem:[%s0 + $0xb8] sm:$0xff]
  %v314 = vld [vmem:[%s0 + $0xc0] sm:$0xff]
  %v315 = vld [vmem:[%s0 + $0xc8] sm:$0xff]
  %v316 = vld [vmem:[%s0 + $0xd0] sm:$0xff]
  %v317 = vld [vmem:[%s0 + $0xd8] sm:$0xff]
  %v318 = vld [vmem:[%s0 + $0xe0] sm:$0xff]
  %v319 = vld [vmem:[%s0 + $0xe8] sm:$0xff]
  %v320 = vld [vmem:[%s0 + $0xf0] sm:$0xff]
  %v321 = vld [vmem:[%s0 + $0xf8] sm:$0xff]
  %v354 = vunpack.c.l.b16 %v290
  %v355 = vunpack.c.h.b16 %v290
  %v356 = vunpack.c.l.b16 %v291
  %v357 = vunpack.c.h.b16 %v291
  %v358 = vunpack.c.l.b16 %v292
  %v359 = vunpack.c.h.b16 %v292
  %v360 = vunpack.c.l.b16 %v293
  %v361 = vunpack.c.h.b16 %v293
  %v362 = vunpack.c.l.b16 %v294
  %v363 = vunpack.c.h.b16 %v294
  %v364 = vunpack.c.l.b16 %v295
  %v365 = vunpack.c.h.b16 %v295
  %v366 = vunpack.c.l.b16 %v296
  %v367 = vunpack.c.h.b16 %v296
  %v368 = vunpack.c.l.b16 %v297
  %v369 = vunpack.c.h.b16 %v297
  %v370 = vunpack.c.l.b16 %v298
  %v371 = vunpack.c.h.b16 %v298
  %v372 = vunpack.c.l.b16 %v299
  %v373 = vunpack.c.h.b16 %v299
  %v374 = vunpack.c.l.b16 %v300
  %v375 = vunpack.c.h.b16 %v300
  %v376 = vunpack.c.l.b16 %v301
  %v377 = vunpack.c.h.b16 %v301
  %v378 = vunpack.c.l.b16 %v302
  %v379 = vunpack.c.h.b16 %v302
  %v380 = vunpack.c.l.b16 %v303
  %v381 = vunpack.c.h.b16 %v303
  %v382 = vunpack.c.l.b16 %v304
  %v383 = vunpack.c.h.b16 %v304
  %v384 = vunpack.c.l.b16 %v305
  %v385 = vunpack.c.h.b16 %v305
  %v386 = vunpack.c.l.b16 %v306
  %v387 = vunpack.c.h.b16 %v306
  %v388 = vunpack.c.l.b16 %v307
  %v389 = vunpack.c.h.b16 %v307
  %v390 = vunpack.c.l.b16 %v308
  %v391 = vunpack.c.h.b16 %v308
  %v392 = vunpack.c.l.b16 %v309
  %v393 = vunpack.c.h.b16 %v309
  %v394 = vunpack.c.l.b16 %v310
  %v395 = vunpack.c.h.b16 %v310
  %v396 = vunpack.c.l.b16 %v311
  %v397 = vunpack.c.h.b16 %v311
  %v398 = vunpack.c.l.b16 %v312
  %v399 = vunpack.c.h.b16 %v312
  %v400 = vunpack.c.l.b16 %v313
  %v401 = vunpack.c.h.b16 %v313
  %v402 = vunpack.c.l.b16 %v314
  %v403 = vunpack.c.h.b16 %v314
  %v404 = vunpack.c.l.b16 %v315
  %v405 = vunpack.c.h.b16 %v315
  %v406 = vunpack.c.l.b16 %v316
  %v407 = vunpack.c.h.b16 %v316
  %v408 = vunpack.c.l.b16 %v317
  %v409 = vunpack.c.h.b16 %v317
  %v410 = vunpack.c.l.b16 %v318
  %v411 = vunpack.c.h.b16 %v318
  %v412 = vunpack.c.l.b16 %v319
  %v413 = vunpack.c.h.b16 %v319
  %v414 = vunpack.c.l.b16 %v320
  %v415 = vunpack.c.h.b16 %v320
  %v416 = vunpack.c.l.b16 %v321
  %v417 = vunpack.c.h.b16 %v321
  %v418 = vpack.c.b16 %v356, %v354
  %v419 = vpack.c.b16 %v357, %v355
  %v420 = vpack.c.b16 %v360, %v358
  %v421 = vpack.c.b16 %v361, %v359
  %v422 = vpack.c.b16 %v364, %v362
  %v423 = vpack.c.b16 %v365, %v363
  %v424 = vpack.c.b16 %v368, %v366
  %v425 = vpack.c.b16 %v369, %v367
  %v426 = vpack.c.b16 %v372, %v370
  %v427 = vpack.c.b16 %v373, %v371
  %v428 = vpack.c.b16 %v376, %v374
  %v429 = vpack.c.b16 %v377, %v375
  %v430 = vpack.c.b16 %v380, %v378
  %v431 = vpack.c.b16 %v381, %v379
  %v432 = vpack.c.b16 %v384, %v382
  %v433 = vpack.c.b16 %v385, %v383
  %v434 = vpack.c.b16 %v388, %v386
  %v435 = vpack.c.b16 %v389, %v387
  %v436 = vpack.c.b16 %v392, %v390
  %v437 = vpack.c.b16 %v393, %v391
  %v438 = vpack.c.b16 %v396, %v394
  %v439 = vpack.c.b16 %v397, %v395
  %v440 = vpack.c.b16 %v400, %v398
  %v441 = vpack.c.b16 %v401, %v399
  %v442 = vpack.c.b16 %v404, %v402
  %v443 = vpack.c.b16 %v405, %v403
  %v444 = vpack.c.b16 %v408, %v406
  %v445 = vpack.c.b16 %v409, %v407
  %v446 = vpack.c.b16 %v412, %v410
  %v447 = vpack.c.b16 %v413, %v411
  %v448 = vpack.c.b16 %v416, %v414
  %v449 = vpack.c.b16 %v417, %v415
  %482 = vmatprep.subr.bf16.mxu0 0
  %483 = vmatpush1.bf16.msra.mxu0 %v274
  %484 = vmatprep.subr.bf16.mxu0 0
  %485 = vmatpush1.bf16.msra.mxu0 %v275
  %486 = vmatprep.subr.bf16.mxu0 0
  %487 = vmatpush1.bf16.msra.mxu0 %v276
  %488 = vmatprep.subr.bf16.mxu0 0
  %489 = vmatpush1.bf16.msra.mxu0 %v277
  %490 = vmatprep.subr.bf16.mxu0 0
  %491 = vmatpush1.bf16.msra.mxu0 %v278
  %492 = vmatprep.subr.bf16.mxu0 0
  %493 = vmatpush1.bf16.msra.mxu0 %v279
  %494 = vmatprep.subr.bf16.mxu0 0
  %495 = vmatpush1.bf16.msra.mxu0 %v280
  %496 = vmatprep.subr.bf16.mxu0 0
  %497 = vmatpush1.bf16.msra.mxu0 %v281
  %498 = vmatprep.subr.bf16.mxu0 0
  %499 = vmatpush1.bf16.msra.mxu0 %v282
  %500 = vmatprep.subr.bf16.mxu0 0
  %501 = vmatpush1.bf16.msra.mxu0 %v283
  %502 = vmatprep.subr.bf16.mxu0 0
  %503 = vmatpush1.bf16.msra.mxu0 %v284
  %504 = vmatprep.subr.bf16.mxu0 0
  %505 = vmatpush1.bf16.msra.mxu0 %v285
  %506 = vmatprep.subr.bf16.mxu0 0
  %507 = vmatpush1.bf16.msra.mxu0 %v286
  %508 = vmatprep.subr.bf16.mxu0 0
  %509 = vmatpush1.bf16.msra.mxu0 %v287
  %510 = vmatprep.subr.bf16.mxu0 0
  %511 = vmatpush1.bf16.msra.mxu0 %v288
  %512 = vmatprep.subr.bf16.mxu0 0
  %513 = vmatpush1.bf16.msra.mxu0 %v289
  %514 = vmatprep.mubr.bf16.mxu0 %v419
  %515 = vmatmul.mubr.bf16.gmra.mrb[0].mxu0 %v418
  %v516 = vpop.f32.mrb[0].mxu0
  %v517 = vadd.f32 0.0, %v516
  %v518 = vpop.f32.mrb[0].mxu0
  %v519 = vpop.f32.mrb[0].mxu0
  %v520 = vadd.f32 0.0, %v519
  %v521 = vpop.f32.mrb[0].mxu0
  %522 = vmatprep.mubr.bf16.mxu0 %v421
  %523 = vmatmul.mubr.bf16.gmra.mrb[0].mxu0 %v420
  %v524 = vpop.f32.mrb[0].mxu0
  %v525 = vadd.f32 0.0, %v524
  %v526 = vpop.f32.mrb[0].mxu0
  %v527 = vpop.f32.mrb[0].mxu0
  %v528 = vadd.f32 0.0, %v527
  %v529 = vpop.f32.mrb[0].mxu0
  %530 = vmatprep.mubr.bf16.mxu0 %v423
  %531 = vmatmul.mubr.bf16.gmra.mrb[0].mxu0 %v422
  %v532 = vpop.f32.mrb[0].mxu0
  %v533 = vadd.f32 0.0, %v532
  %v534 = vpop.f32.mrb[0].mxu0
  %v535 = vpop.f32.mrb[0].mxu0
  %v536 = vadd.f32 0.0, %v535
  %v537 = vpop.f32.mrb[0].mxu0
  %538 = vmatprep.mubr.bf16.mxu0 %v425
  %539 = vmatmul.mubr.bf16.gmra.mrb[0].mxu0 %v424
  %v540 = vpop.f32.mrb[0].mxu0
  %v541 = vadd.f32 0.0, %v540
  %v542 = vpop.f32.mrb[0].mxu0
  %v543 = vpop.f32.mrb[0].mxu0
  %v544 = vadd.f32 0.0, %v543
  %v545 = vpop.f32.mrb[0].mxu0
  %546 = vmatprep.mubr.bf16.mxu0 %v427
  %547 = vmatmul.mubr.bf16.gmra.mrb[0].mxu0 %v426
  %v548 = vpop.f32.mrb[0].mxu0
  %v549 = vadd.f32 0.0, %v548
  %v550 = vpop.f32.mrb[0].mxu0
  %v551 = vpop.f32.mrb[0].mxu0
  %v552 = vadd.f32 0.0, %v551
  %v553 = vpop.f32.mrb[0].mxu0
  %554 = vmatprep.mubr.bf16.mxu0 %v429
  %555 = vmatmul.mubr.bf16.gmra.mrb[0].mxu0 %v428
  %v556 = vpop.f32.mrb[0].mxu0
  %v557 = vadd.f32 0.0, %v556
  %v558 = vpop.f32.mrb[0].mxu0
  %v559 = vpop.f32.mrb[0].mxu0
  %v560 = vadd.f32 0.0, %v559
  %v561 = vpop.f32.mrb[0].mxu0
  %562 = vmatprep.mubr.bf16.mxu0 %v431
  %563 = vmatmul.mubr.bf16.gmra.mrb[0].mxu0 %v430
  %v564 = vpop.f32.mrb[0].mxu0
  %v565 = vadd.f32 0.0, %v564
  %v566 = vpop.f32.mrb[0].mxu0
  %v567 = vpop.f32.mrb[0].mxu0
  %v568 = vadd.f32 0.0, %v567
  %v569 = vpop.f32.mrb[0].mxu0
  %570 = vmatprep.mubr.bf16.mxu0 %v433
  %571 = vmatmul.mubr.bf16.gmra.mrb[0].mxu0 %v432
  %v572 = vpop.f32.mrb[0].mxu0
  %v573 = vadd.f32 0.0, %v572
  %v574 = vpop.f32.mrb[0].mxu0
  %v575 = vpop.f32.mrb[0].mxu0
  %v576 = vadd.f32 0.0, %v575
  %v577 = vpop.f32.mrb[0].mxu0
  %578 = vmatprep.mubr.bf16.mxu0 %v435
  %579 = vmatmul.mubr.bf16.gmra.mrb[0].mxu0 %v434
  %v580 = vpop.f32.mrb[0].mxu0
  %v581 = vadd.f32 0.0, %v580
  %v582 = vpop.f32.mrb[0].mxu0
  %v583 = vpop.f32.mrb[0].mxu0
  %v584 = vadd.f32 0.0, %v583
  %v585 = vpop.f32.mrb[0].mxu0
  %586 = vmatprep.mubr.bf16.mxu0 %v437
  %587 = vmatmul.mubr.bf16.gmra.mrb[0].mxu0 %v436
  %v588 = vpop.f32.mrb[0].mxu0
  %v589 = vadd.f32 0.0, %v588
  %v590 = vpop.f32.mrb[0].mxu0
  %v591 = vpop.f32.mrb[0].mxu0
  %v592 = vadd.f32 0.0, %v591
  %v593 = vpop.f32.mrb[0].mxu0
  %594 = vmatprep.mubr.bf16.mxu0 %v439
  %595 = vmatmul.mubr.bf16.gmra.mrb[0].mxu0 %v438
  %v596 = vpop.f32.mrb[0].mxu0
  %v597 = vadd.f32 0.0, %v596
  %v598 = vpop.f32.mrb[0].mxu0
  %v599 = vpop.f32.mrb[0].mxu0
  %v600 = vadd.f32 0.0, %v599
  %v601 = vpop.f32.mrb[0].mxu0
  %602 = vmatprep.mubr.bf16.mxu0 %v441
  %603 = vmatmul.mubr.bf16.gmra.mrb[0].mxu0 %v440
  %v604 = vpop.f32.mrb[0].mxu0
  %v605 = vadd.f32 0.0, %v604
  %v606 = vpop.f32.mrb[0].mxu0
  %v607 = vpop.f32.mrb[0].mxu0
  %v608 = vadd.f32 0.0, %v607
  %v609 = vpop.f32.mrb[0].mxu0
  %610 = vmatprep.mubr.bf16.mxu0 %v443
  %611 = vmatmul.mubr.bf16.gmra.mrb[0].mxu0 %v442
  %v612 = vpop.f32.mrb[0].mxu0
  %v613 = vadd.f32 0.0, %v612
  %v614 = vpop.f32.mrb[0].mxu0
  %v615 = vpop.f32.mrb[0].mxu0
  %v616 = vadd.f32 0.0, %v615
  %v617 = vpop.f32.mrb[0].mxu0
  %618 = vmatprep.mubr.bf16.mxu0 %v445
  %619 = vmatmul.mubr.bf16.gmra.mrb[0].mxu0 %v444
  %v620 = vpop.f32.mrb[0].mxu0
  %v621 = vadd.f32 0.0, %v620
  %v622 = vpop.f32.mrb[0].mxu0
  %v623 = vpop.f32.mrb[0].mxu0
  %v624 = vadd.f32 0.0, %v623
  %v625 = vpop.f32.mrb[0].mxu0
  %626 = vmatprep.mubr.bf16.mxu0 %v447
  %627 = vmatmul.mubr.bf16.gmra.mrb[0].mxu0 %v446
  %v628 = vpop.f32.mrb[0].mxu0
  %v629 = vadd.f32 0.0, %v628
  %v630 = vpop.f32.mrb[0].mxu0
  %v631 = vpop.f32.mrb[0].mxu0
  %v632 = vadd.f32 0.0, %v631
  %v633 = vpop.f32.mrb[0].mxu0
  %634 = vmatprep.mubr.bf16.mxu0 %v449
  %635 = vmatmul.mubr.bf16.gmra.mrb[0].mxu0 %v448
  %v636 = vpop.f32.mrb[0].mxu0
  %v637 = vadd.f32 0.0, %v636
  %v638 = vpop.f32.mrb[0].mxu0
  %v639 = vpop.f32.mrb[0].mxu0
  %v640 = vadd.f32 0.0, %v639
  %v641 = vpop.f32.mrb[0].mxu0
  %642 = vdwg.mxu0
  %v643 = vmul.f32 %v18, 0.5
  %v644 = vmul.f32 %v19, 0.5
  %v645 = vmul.f32 %v20, 0.5
  %v646 = vmul.f32 %v21, 0.5
  %v647 = vmul.f32 %v22, 0.5
  %v648 = vmul.f32 %v23, 0.5
  %v649 = vmul.f32 %v24, 0.5
  %v650 = vmul.f32 %v25, 0.5
  %v651 = vmul.f32 %v26, 0.5
  %v652 = vmul.f32 %v27, 0.5
  %v653 = vmul.f32 %v28, 0.5
  %v654 = vmul.f32 %v29, 0.5
  %v655 = vmul.f32 %v30, 0.5
  %v656 = vmul.f32 %v31, 0.5
  %v657 = vmul.f32 %v32, 0.5
  %v658 = vmul.f32 %v33, 0.5
  %v659 = vmul.f32 %v34, 0.5
  %v660 = vmul.f32 %v35, 0.5
  %v661 = vmul.f32 %v36, 0.5
  %v662 = vmul.f32 %v37, 0.5
  %v663 = vmul.f32 %v38, 0.5
  %v664 = vmul.f32 %v39, 0.5
  %v665 = vmul.f32 %v40, 0.5
  %v666 = vmul.f32 %v41, 0.5
  %v667 = vmul.f32 %v42, 0.5
  %v668 = vmul.f32 %v43, 0.5
  %v669 = vmul.f32 %v44, 0.5
  %v670 = vmul.f32 %v45, 0.5
  %v671 = vmul.f32 %v46, 0.5
  %v672 = vmul.f32 %v47, 0.5
  %v673 = vmul.f32 %v48, 0.5
  %v674 = vmul.f32 %v49, 0.5
  %v675 = vld [vmem:[%s2] sm:$0xff]
  %v676 = vld [vmem:[%s2 + $0x8] sm:$0xff]
  %v677 = vld [vmem:[%s2 + $0x10] sm:$0xff]
  %v678 = vld [vmem:[%s2 + $0x18] sm:$0xff]
  %v679 = vld [vmem:[%s2 + $0x20] sm:$0xff]
  %v680 = vld [vmem:[%s2 + $0x28] sm:$0xff]
  %v681 = vld [vmem:[%s2 + $0x30] sm:$0xff]
  %v682 = vld [vmem:[%s2 + $0x38] sm:$0xff]
  %v683 = vld [vmem:[%s2 + $0x40] sm:$0xff]
  %v684 = vld [vmem:[%s2 + $0x48] sm:$0xff]
  %v685 = vld [vmem:[%s2 + $0x50] sm:$0xff]
  %v686 = vld [vmem:[%s2 + $0x58] sm:$0xff]
  %v687 = vld [vmem:[%s2 + $0x60] sm:$0xff]
  %v688 = vld [vmem:[%s2 + $0x68] sm:$0xff]
  %v689 = vld [vmem:[%s2 + $0x70] sm:$0xff]
  %v690 = vld [vmem:[%s2 + $0x78] sm:$0xff]
  %v691 = vld [vmem:[%s2 + $0x80] sm:$0xff]
  %v692 = vld [vmem:[%s2 + $0x88] sm:$0xff]
  %v693 = vld [vmem:[%s2 + $0x90] sm:$0xff]
  %v694 = vld [vmem:[%s2 + $0x98] sm:$0xff]
  %v695 = vld [vmem:[%s2 + $0xa0] sm:$0xff]
  %v696 = vld [vmem:[%s2 + $0xa8] sm:$0xff]
  %v697 = vld [vmem:[%s2 + $0xb0] sm:$0xff]
  %v698 = vld [vmem:[%s2 + $0xb8] sm:$0xff]
  %v699 = vld [vmem:[%s2 + $0xc0] sm:$0xff]
  %v700 = vld [vmem:[%s2 + $0xc8] sm:$0xff]
  %v701 = vld [vmem:[%s2 + $0xd0] sm:$0xff]
  %v702 = vld [vmem:[%s2 + $0xd8] sm:$0xff]
  %v703 = vld [vmem:[%s2 + $0xe0] sm:$0xff]
  %v704 = vld [vmem:[%s2 + $0xe8] sm:$0xff]
  %v705 = vld [vmem:[%s2 + $0xf0] sm:$0xff]
  %v706 = vld [vmem:[%s2 + $0xf8] sm:$0xff]
  %v707 = vadd.f32 %v643, %v675
  %v708 = vadd.f32 %v644, %v676
  %v709 = vadd.f32 %v645, %v677
  %v710 = vadd.f32 %v646, %v678
  %v711 = vadd.f32 %v647, %v679
  %v712 = vadd.f32 %v648, %v680
  %v713 = vadd.f32 %v649, %v681
  %v714 = vadd.f32 %v650, %v682
  %v715 = vadd.f32 %v651, %v683
  %v716 = vadd.f32 %v652, %v684
  %v717 = vadd.f32 %v653, %v685
  %v718 = vadd.f32 %v654, %v686
  %v719 = vadd.f32 %v655, %v687
  %v720 = vadd.f32 %v656, %v688
  %v721 = vadd.f32 %v657, %v689
  %v722 = vadd.f32 %v658, %v690
  %v723 = vadd.f32 %v659, %v691
  %v724 = vadd.f32 %v660, %v692
  %v725 = vadd.f32 %v661, %v693
  %v726 = vadd.f32 %v662, %v694
  %v727 = vadd.f32 %v663, %v695
  %v728 = vadd.f32 %v664, %v696
  %v729 = vadd.f32 %v665, %v697
  %v730 = vadd.f32 %v666, %v698
  %v731 = vadd.f32 %v667, %v699
  %v732 = vadd.f32 %v668, %v700
  %v733 = vadd.f32 %v669, %v701
  %v734 = vadd.f32 %v670, %v702
  %v735 = vadd.f32 %v671, %v703
  %v736 = vadd.f32 %v672, %v704
  %v737 = vadd.f32 %v673, %v705
  %v738 = vadd.f32 %v674, %v706
  %v739 = vmul.f32 %v50, 0.5
  %v740 = vmul.f32 %v51, 0.5
  %v741 = vmul.f32 %v52, 0.5
  %v742 = vmul.f32 %v53, 0.5
  %v743 = vmul.f32 %v54, 0.5
  %v744 = vmul.f32 %v55, 0.5
  %v745 = vmul.f32 %v56, 0.5
  %v746 = vmul.f32 %v57, 0.5
  %v747 = vmul.f32 %v58, 0.5
  %v748 = vmul.f32 %v59, 0.5
  %v749 = vmul.f32 %v60, 0.5
  %v750 = vmul.f32 %v61, 0.5
  %v751 = vmul.f32 %v62, 0.5
  %v752 = vmul.f32 %v63, 0.5
  %v753 = vmul.f32 %v64, 0.5
  %v754 = vmul.f32 %v65, 0.5
  %v755 = vmul.f32 %v66, 0.5
  %v756 = vmul.f32 %v67, 0.5
  %v757 = vmul.f32 %v68, 0.5
  %v758 = vmul.f32 %v69, 0.5
  %v759 = vmul.f32 %v70, 0.5
  %v760 = vmul.f32 %v71, 0.5
  %v761 = vmul.f32 %v72, 0.5
  %v762 = vmul.f32 %v73, 0.5
  %v763 = vmul.f32 %v74, 0.5
  %v764 = vmul.f32 %v75, 0.5
  %v765 = vmul.f32 %v76, 0.5
  %v766 = vmul.f32 %v77, 0.5
  %v767 = vmul.f32 %v78, 0.5
  %v768 = vmul.f32 %v79, 0.5
  %v769 = vmul.f32 %v80, 0.5
  %v770 = vmul.f32 %v81, 0.5
  %772 = vset.pattern.permute.xlu0 0
  %773 = vperm.xlu0 %772, %v739
  %v774 = vpop.permute.xlu0 %773
  %777 = vset.pattern.permute.xlu0 0
  %778 = vperm.xlu0 %777, %v740
  %v779 = vpop.permute.xlu0 %778
  %782 = vset.pattern.permute.xlu0 0
  %783 = vperm.xlu0 %782, %v741
  %v784 = vpop.permute.xlu0 %783
  %787 = vset.pattern.permute.xlu0 0
  %788 = vperm.xlu0 %787, %v742
  %v789 = vpop.permute.xlu0 %788
  %792 = vset.pattern.permute.xlu0 0
  %793 = vperm.xlu0 %792, %v743
  %v794 = vpop.permute.xlu0 %793
  %797 = vset.pattern.permute.xlu0 0
  %798 = vperm.xlu0 %797, %v744
  %v799 = vpop.permute.xlu0 %798
  %802 = vset.pattern.permute.xlu0 0
  %803 = vperm.xlu0 %802, %v745
  %v804 = vpop.permute.xlu0 %803
  %807 = vset.pattern.permute.xlu0 0
  %808 = vperm.xlu0 %807, %v746
  %v809 = vpop.permute.xlu0 %808
  %812 = vset.pattern.permute.xlu0 0
  %813 = vperm.xlu0 %812, %v747
  %v814 = vpop.permute.xlu0 %813
  %817 = vset.pattern.permute.xlu0 0
  %818 = vperm.xlu0 %817, %v748
  %v819 = vpop.permute.xlu0 %818
  %822 = vset.pattern.permute.xlu0 0
  %823 = vperm.xlu0 %822, %v749
  %v824 = vpop.permute.xlu0 %823
  %827 = vset.pattern.permute.xlu0 0
  %828 = vperm.xlu0 %827, %v750
  %v829 = vpop.permute.xlu0 %828
  %832 = vset.pattern.permute.xlu0 0
  %833 = vperm.xlu0 %832, %v751
  %v834 = vpop.permute.xlu0 %833
  %837 = vset.pattern.permute.xlu0 0
  %838 = vperm.xlu0 %837, %v752
  %v839 = vpop.permute.xlu0 %838
  %842 = vset.pattern.permute.xlu0 0
  %843 = vperm.xlu0 %842, %v753
  %v844 = vpop.permute.xlu0 %843
  %847 = vset.pattern.permute.xlu0 0
  %848 = vperm.xlu0 %847, %v754
  %v849 = vpop.permute.xlu0 %848
  %852 = vset.pattern.permute.xlu0 0
  %853 = vperm.xlu0 %852, %v755
  %v854 = vpop.permute.xlu0 %853
  %857 = vset.pattern.permute.xlu0 0
  %858 = vperm.xlu0 %857, %v756
  %v859 = vpop.permute.xlu0 %858
  %862 = vset.pattern.permute.xlu0 0
  %863 = vperm.xlu0 %862, %v757
  %v864 = vpop.permute.xlu0 %863
  %867 = vset.pattern.permute.xlu0 0
  %868 = vperm.xlu0 %867, %v758
  %v869 = vpop.permute.xlu0 %868
  %872 = vset.pattern.permute.xlu0 0
  %873 = vperm.xlu0 %872, %v759
  %v874 = vpop.permute.xlu0 %873
  %877 = vset.pattern.permute.xlu0 0
  %878 = vperm.xlu0 %877, %v760
  %v879 = vpop.permute.xlu0 %878
  %882 = vset.pattern.permute.xlu0 0
  %883 = vperm.xlu0 %882, %v761
  %v884 = vpop.permute.xlu0 %883
  %887 = vset.pattern.permute.xlu0 0
  %888 = vperm.xlu0 %887, %v762
  %v889 = vpop.permute.xlu0 %888
  %892 = vset.pattern.permute.xlu0 0
  %893 = vperm.xlu0 %892, %v763
  %v894 = vpop.permute.xlu0 %893
  %897 = vset.pattern.permute.xlu0 0
  %898 = vperm.xlu0 %897, %v764
  %v899 = vpop.permute.xlu0 %898
  %902 = vset.pattern.permute.xlu0 0
  %903 = vperm.xlu0 %902, %v765
  %v904 = vpop.permute.xlu0 %903
  %907 = vset.pattern.permute.xlu0 0
  %908 = vperm.xlu0 %907, %v766
  %v909 = vpop.permute.xlu0 %908
  %912 = vset.pattern.permute.xlu0 0
  %913 = vperm.xlu0 %912, %v767
  %v914 = vpop.permute.xlu0 %913
  %917 = vset.pattern.permute.xlu0 0
  %918 = vperm.xlu0 %917, %v768
  %v919 = vpop.permute.xlu0 %918
  %922 = vset.pattern.permute.xlu0 0
  %923 = vperm.xlu0 %922, %v769
  %v924 = vpop.permute.xlu0 %923
  %927 = vset.pattern.permute.xlu0 0
  %928 = vperm.xlu0 %927, %v770
  %v929 = vpop.permute.xlu0 %928
  %v931 = vmul.f32 %v774, %v517
  %v932 = vmul.f32 %v779, %v520
  %v933 = vmul.f32 %v784, %v525
  %v934 = vmul.f32 %v789, %v528
  %v935 = vmul.f32 %v794, %v533
  %v936 = vmul.f32 %v799, %v536
  %v937 = vmul.f32 %v804, %v541
  %v938 = vmul.f32 %v809, %v544
  %v939 = vmul.f32 %v814, %v549
  %v940 = vmul.f32 %v819, %v552
  %v941 = vmul.f32 %v824, %v557
  %v942 = vmul.f32 %v829, %v560
  %v943 = vmul.f32 %v834, %v565
  %v944 = vmul.f32 %v839, %v568
  %v945 = vmul.f32 %v844, %v573
  %v946 = vmul.f32 %v849, %v576
  %v947 = vmul.f32 %v854, %v581
  %v948 = vmul.f32 %v859, %v584
  %v949 = vmul.f32 %v864, %v589
  %v950 = vmul.f32 %v869, %v592
  %v951 = vmul.f32 %v874, %v597
  %v952 = vmul.f32 %v879, %v600
  %v953 = vmul.f32 %v884, %v605
  %v954 = vmul.f32 %v889, %v608
  %v955 = vmul.f32 %v894, %v613
  %v956 = vmul.f32 %v899, %v616
  %v957 = vmul.f32 %v904, %v621
  %v958 = vmul.f32 %v909, %v624
  %v959 = vmul.f32 %v914, %v629
  %v960 = vmul.f32 %v919, %v632
  %v961 = vmul.f32 %v924, %v637
  %v962 = vmul.f32 %v929, %v640
  %v963 = vadd.f32 %v707, %v931
  %v964 = vadd.f32 %v708, %v932
  %v965 = vadd.f32 %v709, %v933
  %v966 = vadd.f32 %v710, %v934
  %v967 = vadd.f32 %v711, %v935
  %v968 = vadd.f32 %v712, %v936
  %v969 = vadd.f32 %v713, %v937
  %v970 = vadd.f32 %v714, %v938
  %v971 = vadd.f32 %v715, %v939
  %v972 = vadd.f32 %v716, %v940
  %v973 = vadd.f32 %v717, %v941
  %v974 = vadd.f32 %v718, %v942
  %v975 = vadd.f32 %v719, %v943
  %v976 = vadd.f32 %v720, %v944
  %v977 = vadd.f32 %v721, %v945
  %v978 = vadd.f32 %v722, %v946
  %v979 = vadd.f32 %v723, %v947
  %v980 = vadd.f32 %v724, %v948
  %v981 = vadd.f32 %v725, %v949
  %v982 = vadd.f32 %v726, %v950
  %v983 = vadd.f32 %v727, %v951
  %v984 = vadd.f32 %v728, %v952
  %v985 = vadd.f32 %v729, %v953
  %v986 = vadd.f32 %v730, %v954
  %v987 = vadd.f32 %v731, %v955
  %v988 = vadd.f32 %v732, %v956
  %v989 = vadd.f32 %v733, %v957
  %v990 = vadd.f32 %v734, %v958
  %v991 = vadd.f32 %v735, %v959
  %v992 = vadd.f32 %v736, %v960
  %v993 = vadd.f32 %v737, %v961
  %v994 = vadd.f32 %v738, %v962
  %v995 = vmul.f32 %v85, %v963
  %v996 = vmul.f32 %v90, %v964
  %v997 = vmul.f32 %v95, %v965
  %v998 = vmul.f32 %v100, %v966
  %v999 = vmul.f32 %v105, %v967
  %v1000 = vmul.f32 %v110, %v968
  %v1001 = vmul.f32 %v115, %v969
  %v1002 = vmul.f32 %v120, %v970
  %v1003 = vmul.f32 %v125, %v971
  %v1004 = vmul.f32 %v130, %v972
  %v1005 = vmul.f32 %v135, %v973
  %v1006 = vmul.f32 %v140, %v974
  %v1007 = vmul.f32 %v145, %v975
  %v1008 = vmul.f32 %v150, %v976
  %v1009 = vmul.f32 %v155, %v977
  %v1010 = vmul.f32 %v160, %v978
  %v1011 = vmul.f32 %v165, %v979
  %v1012 = vmul.f32 %v170, %v980
  %v1013 = vmul.f32 %v175, %v981
  %v1014 = vmul.f32 %v180, %v982
  %v1015 = vmul.f32 %v185, %v983
  %v1016 = vmul.f32 %v190, %v984
  %v1017 = vmul.f32 %v195, %v985
  %v1018 = vmul.f32 %v200, %v986
  %v1019 = vmul.f32 %v205, %v987
  %v1020 = vmul.f32 %v210, %v988
  %v1021 = vmul.f32 %v215, %v989
  %v1022 = vmul.f32 %v220, %v990
  %v1023 = vmul.f32 %v225, %v991
  %v1024 = vmul.f32 %v230, %v992
  %v1025 = vmul.f32 %v235, %v993
  %v1026 = vmul.f32 %v240, %v994
  %v1027 = vpack.c.bf16 %v996, %v995
  %v1028 = vpack.c.bf16 %v998, %v997
  %v1029 = vpack.c.bf16 %v1000, %v999
  %v1030 = vpack.c.bf16 %v1002, %v1001
  %v1031 = vpack.c.bf16 %v1004, %v1003
  %v1032 = vpack.c.bf16 %v1006, %v1005
  %v1033 = vpack.c.bf16 %v1008, %v1007
  %v1034 = vpack.c.bf16 %v1010, %v1009
  %v1035 = vpack.c.bf16 %v1012, %v1011
  %v1036 = vpack.c.bf16 %v1014, %v1013
  %v1037 = vpack.c.bf16 %v1016, %v1015
  %v1038 = vpack.c.bf16 %v1018, %v1017
  %v1039 = vpack.c.bf16 %v1020, %v1019
  %v1040 = vpack.c.bf16 %v1022, %v1021
  %v1041 = vpack.c.bf16 %v1024, %v1023
  %v1042 = vpack.c.bf16 %v1026, %v1025
  %1043 = vmatprep.subr.bf16.mxu0 0
  %1044 = vmatpush1.bf16.msra.mxu0 %v1027
  %1045 = vmatprep.subr.bf16.mxu0 0
  %1046 = vmatpush1.bf16.msra.mxu0 %v1028
  %1047 = vmatprep.subr.bf16.mxu0 0
  %1048 = vmatpush1.bf16.msra.mxu0 %v1029
  %1049 = vmatprep.subr.bf16.mxu0 0
  %1050 = vmatpush1.bf16.msra.mxu0 %v1030
  %1051 = vmatprep.subr.bf16.mxu0 0
  %1052 = vmatpush1.bf16.msra.mxu0 %v1031
  %1053 = vmatprep.subr.bf16.mxu0 0
  %1054 = vmatpush1.bf16.msra.mxu0 %v1032
  %1055 = vmatprep.subr.bf16.mxu0 0
  %1056 = vmatpush1.bf16.msra.mxu0 %v1033
  %1057 = vmatprep.subr.bf16.mxu0 0
  %1058 = vmatpush1.bf16.msra.mxu0 %v1034
  %1059 = vmatprep.subr.bf16.mxu0 0
  %1060 = vmatpush1.bf16.msra.mxu0 %v1035
  %1061 = vmatprep.subr.bf16.mxu0 0
  %1062 = vmatpush1.bf16.msra.mxu0 %v1036
  %1063 = vmatprep.subr.bf16.mxu0 0
  %1064 = vmatpush1.bf16.msra.mxu0 %v1037
  %1065 = vmatprep.subr.bf16.mxu0 0
  %1066 = vmatpush1.bf16.msra.mxu0 %v1038
  %1067 = vmatprep.subr.bf16.mxu0 0
  %1068 = vmatpush1.bf16.msra.mxu0 %v1039
  %1069 = vmatprep.subr.bf16.mxu0 0
  %1070 = vmatpush1.bf16.msra.mxu0 %v1040
  %1071 = vmatprep.subr.bf16.mxu0 0
  %1072 = vmatpush1.bf16.msra.mxu0 %v1041
  %1073 = vmatprep.subr.bf16.mxu0 0
  %1074 = vmatpush1.bf16.msra.mxu0 %v1042
  %1075 = vmatprep.mubr.bf16.mxu0 %v419
  %1076 = vmatmul.mubr.bf16.gmra.mrb[0].mxu0 %v418
  %v1077 = vpop.f32.mrb[0].mxu0
  %v1078 = vadd.f32 0.0, %v1077
  %v1079 = vpop.f32.mrb[0].mxu0
  %v1080 = vpop.f32.mrb[0].mxu0
  %v1081 = vadd.f32 0.0, %v1080
  %v1082 = vpop.f32.mrb[0].mxu0
  %1083 = vmatprep.mubr.bf16.mxu0 %v421
  %1084 = vmatmul.mubr.bf16.gmra.mrb[0].mxu0 %v420
  %v1085 = vpop.f32.mrb[0].mxu0
  %v1086 = vadd.f32 0.0, %v1085
  %v1087 = vpop.f32.mrb[0].mxu0
  %v1088 = vpop.f32.mrb[0].mxu0
  %v1089 = vadd.f32 0.0, %v1088
  %v1090 = vpop.f32.mrb[0].mxu0
  %1091 = vmatprep.mubr.bf16.mxu0 %v423
  %1092 = vmatmul.mubr.bf16.gmra.mrb[0].mxu0 %v422
  %v1093 = vpop.f32.mrb[0].mxu0
  %v1094 = vadd.f32 0.0, %v1093
  %v1095 = vpop.f32.mrb[0].mxu0
  %v1096 = vpop.f32.mrb[0].mxu0
  %v1097 = vadd.f32 0.0, %v1096
  %v1098 = vpop.f32.mrb[0].mxu0
  %1099 = vmatprep.mubr.bf16.mxu0 %v425
  %1100 = vmatmul.mubr.bf16.gmra.mrb[0].mxu0 %v424
  %v1101 = vpop.f32.mrb[0].mxu0
  %v1102 = vadd.f32 0.0, %v1101
  %v1103 = vpop.f32.mrb[0].mxu0
  %v1104 = vpop.f32.mrb[0].mxu0
  %v1105 = vadd.f32 0.0, %v1104
  %v1106 = vpop.f32.mrb[0].mxu0
  %1107 = vmatprep.mubr.bf16.mxu0 %v427
  %1108 = vmatmul.mubr.bf16.gmra.mrb[0].mxu0 %v426
  %v1109 = vpop.f32.mrb[0].mxu0
  %v1110 = vadd.f32 0.0, %v1109
  %v1111 = vpop.f32.mrb[0].mxu0
  %v1112 = vpop.f32.mrb[0].mxu0
  %v1113 = vadd.f32 0.0, %v1112
  %v1114 = vpop.f32.mrb[0].mxu0
  %1115 = vmatprep.mubr.bf16.mxu0 %v429
  %1116 = vmatmul.mubr.bf16.gmra.mrb[0].mxu0 %v428
  %v1117 = vpop.f32.mrb[0].mxu0
  %v1118 = vadd.f32 0.0, %v1117
  %v1119 = vpop.f32.mrb[0].mxu0
  %v1120 = vpop.f32.mrb[0].mxu0
  %v1121 = vadd.f32 0.0, %v1120
  %v1122 = vpop.f32.mrb[0].mxu0
  %1123 = vmatprep.mubr.bf16.mxu0 %v431
  %1124 = vmatmul.mubr.bf16.gmra.mrb[0].mxu0 %v430
  %v1125 = vpop.f32.mrb[0].mxu0
  %v1126 = vadd.f32 0.0, %v1125
  %v1127 = vpop.f32.mrb[0].mxu0
  %v1128 = vpop.f32.mrb[0].mxu0
  %v1129 = vadd.f32 0.0, %v1128
  %v1130 = vpop.f32.mrb[0].mxu0
  %1131 = vmatprep.mubr.bf16.mxu0 %v433
  %1132 = vmatmul.mubr.bf16.gmra.mrb[0].mxu0 %v432
  %v1133 = vpop.f32.mrb[0].mxu0
  %v1134 = vadd.f32 0.0, %v1133
  %v1135 = vpop.f32.mrb[0].mxu0
  %v1136 = vpop.f32.mrb[0].mxu0
  %v1137 = vadd.f32 0.0, %v1136
  %v1138 = vpop.f32.mrb[0].mxu0
  %1139 = vmatprep.mubr.bf16.mxu0 %v435
  %1140 = vmatmul.mubr.bf16.gmra.mrb[0].mxu0 %v434
  %v1141 = vpop.f32.mrb[0].mxu0
  %v1142 = vadd.f32 0.0, %v1141
  %v1143 = vpop.f32.mrb[0].mxu0
  %v1144 = vpop.f32.mrb[0].mxu0
  %v1145 = vadd.f32 0.0, %v1144
  %v1146 = vpop.f32.mrb[0].mxu0
  %1147 = vmatprep.mubr.bf16.mxu0 %v437
  %1148 = vmatmul.mubr.bf16.gmra.mrb[0].mxu0 %v436
  %v1149 = vpop.f32.mrb[0].mxu0
  %v1150 = vadd.f32 0.0, %v1149
  %v1151 = vpop.f32.mrb[0].mxu0
  %v1152 = vpop.f32.mrb[0].mxu0
  %v1153 = vadd.f32 0.0, %v1152
  %v1154 = vpop.f32.mrb[0].mxu0
  %1155 = vmatprep.mubr.bf16.mxu0 %v439
  %1156 = vmatmul.mubr.bf16.gmra.mrb[0].mxu0 %v438
  %v1157 = vpop.f32.mrb[0].mxu0
  %v1158 = vadd.f32 0.0, %v1157
  %v1159 = vpop.f32.mrb[0].mxu0
  %v1160 = vpop.f32.mrb[0].mxu0
  %v1161 = vadd.f32 0.0, %v1160
  %v1162 = vpop.f32.mrb[0].mxu0
  %1163 = vmatprep.mubr.bf16.mxu0 %v441
  %1164 = vmatmul.mubr.bf16.gmra.mrb[0].mxu0 %v440
  %v1165 = vpop.f32.mrb[0].mxu0
  %v1166 = vadd.f32 0.0, %v1165
  %v1167 = vpop.f32.mrb[0].mxu0
  %v1168 = vpop.f32.mrb[0].mxu0
  %v1169 = vadd.f32 0.0, %v1168
  %v1170 = vpop.f32.mrb[0].mxu0
  %1171 = vmatprep.mubr.bf16.mxu0 %v443
  %1172 = vmatmul.mubr.bf16.gmra.mrb[0].mxu0 %v442
  %v1173 = vpop.f32.mrb[0].mxu0
  %v1174 = vadd.f32 0.0, %v1173
  %v1175 = vpop.f32.mrb[0].mxu0
  %v1176 = vpop.f32.mrb[0].mxu0
  %v1177 = vadd.f32 0.0, %v1176
  %v1178 = vpop.f32.mrb[0].mxu0
  %1179 = vmatprep.mubr.bf16.mxu0 %v445
  %1180 = vmatmul.mubr.bf16.gmra.mrb[0].mxu0 %v444
  %v1181 = vpop.f32.mrb[0].mxu0
  %v1182 = vadd.f32 0.0, %v1181
  %v1183 = vpop.f32.mrb[0].mxu0
  %v1184 = vpop.f32.mrb[0].mxu0
  %v1185 = vadd.f32 0.0, %v1184
  %v1186 = vpop.f32.mrb[0].mxu0
  %1187 = vmatprep.mubr.bf16.mxu0 %v447
  %1188 = vmatmul.mubr.bf16.gmra.mrb[0].mxu0 %v446
  %v1189 = vpop.f32.mrb[0].mxu0
  %v1190 = vadd.f32 0.0, %v1189
  %v1191 = vpop.f32.mrb[0].mxu0
  %v1192 = vpop.f32.mrb[0].mxu0
  %v1193 = vadd.f32 0.0, %v1192
  %v1194 = vpop.f32.mrb[0].mxu0
  %1195 = vmatprep.mubr.bf16.mxu0 %v449
  %1196 = vmatmul.mubr.bf16.gmra.mrb[0].mxu0 %v448
  %v1197 = vpop.f32.mrb[0].mxu0
  %v1198 = vadd.f32 0.0, %v1197
  %v1199 = vpop.f32.mrb[0].mxu0
  %v1200 = vpop.f32.mrb[0].mxu0
  %v1201 = vadd.f32 0.0, %v1200
  %v1202 = vpop.f32.mrb[0].mxu0
  %1203 = vdwg.mxu0
  %v1204 = vmul.f32 %v963, 0.5
  %v1205 = vmul.f32 %v964, 0.5
  %v1206 = vmul.f32 %v965, 0.5
  %v1207 = vmul.f32 %v966, 0.5
  %v1208 = vmul.f32 %v967, 0.5
  %v1209 = vmul.f32 %v968, 0.5
  %v1210 = vmul.f32 %v969, 0.5
  %v1211 = vmul.f32 %v970, 0.5
  %v1212 = vmul.f32 %v971, 0.5
  %v1213 = vmul.f32 %v972, 0.5
  %v1214 = vmul.f32 %v973, 0.5
  %v1215 = vmul.f32 %v974, 0.5
  %v1216 = vmul.f32 %v975, 0.5
  %v1217 = vmul.f32 %v976, 0.5
  %v1218 = vmul.f32 %v977, 0.5
  %v1219 = vmul.f32 %v978, 0.5
  %v1220 = vmul.f32 %v979, 0.5
  %v1221 = vmul.f32 %v980, 0.5
  %v1222 = vmul.f32 %v981, 0.5
  %v1223 = vmul.f32 %v982, 0.5
  %v1224 = vmul.f32 %v983, 0.5
  %v1225 = vmul.f32 %v984, 0.5
  %v1226 = vmul.f32 %v985, 0.5
  %v1227 = vmul.f32 %v986, 0.5
  %v1228 = vmul.f32 %v987, 0.5
  %v1229 = vmul.f32 %v988, 0.5
  %v1230 = vmul.f32 %v989, 0.5
  %v1231 = vmul.f32 %v990, 0.5
  %v1232 = vmul.f32 %v991, 0.5
  %v1233 = vmul.f32 %v992, 0.5
  %v1234 = vmul.f32 %v993, 0.5
  %v1235 = vmul.f32 %v994, 0.5
  %v1236 = vadd.f32 %v1204, %v675
  %v1237 = vadd.f32 %v1205, %v676
  %v1238 = vadd.f32 %v1206, %v677
  %v1239 = vadd.f32 %v1207, %v678
  %v1240 = vadd.f32 %v1208, %v679
  %v1241 = vadd.f32 %v1209, %v680
  %v1242 = vadd.f32 %v1210, %v681
  %v1243 = vadd.f32 %v1211, %v682
  %v1244 = vadd.f32 %v1212, %v683
  %v1245 = vadd.f32 %v1213, %v684
  %v1246 = vadd.f32 %v1214, %v685
  %v1247 = vadd.f32 %v1215, %v686
  %v1248 = vadd.f32 %v1216, %v687
  %v1249 = vadd.f32 %v1217, %v688
  %v1250 = vadd.f32 %v1218, %v689
  %v1251 = vadd.f32 %v1219, %v690
  %v1252 = vadd.f32 %v1220, %v691
  %v1253 = vadd.f32 %v1221, %v692
  %v1254 = vadd.f32 %v1222, %v693
  %v1255 = vadd.f32 %v1223, %v694
  %v1256 = vadd.f32 %v1224, %v695
  %v1257 = vadd.f32 %v1225, %v696
  %v1258 = vadd.f32 %v1226, %v697
  %v1259 = vadd.f32 %v1227, %v698
  %v1260 = vadd.f32 %v1228, %v699
  %v1261 = vadd.f32 %v1229, %v700
  %v1262 = vadd.f32 %v1230, %v701
  %v1263 = vadd.f32 %v1231, %v702
  %v1264 = vadd.f32 %v1232, %v703
  %v1265 = vadd.f32 %v1233, %v704
  %v1266 = vadd.f32 %v1234, %v705
  %v1267 = vadd.f32 %v1235, %v706
  %v1268 = vmul.f32 %v774, %v1078
  %v1269 = vmul.f32 %v779, %v1081
  %v1270 = vmul.f32 %v784, %v1086
  %v1271 = vmul.f32 %v789, %v1089
  %v1272 = vmul.f32 %v794, %v1094
  %v1273 = vmul.f32 %v799, %v1097
  %v1274 = vmul.f32 %v804, %v1102
  %v1275 = vmul.f32 %v809, %v1105
  %v1276 = vmul.f32 %v814, %v1110
  %v1277 = vmul.f32 %v819, %v1113
  %v1278 = vmul.f32 %v824, %v1118
  %v1279 = vmul.f32 %v829, %v1121
  %v1280 = vmul.f32 %v834, %v1126
  %v1281 = vmul.f32 %v839, %v1129
  %v1282 = vmul.f32 %v844, %v1134
  %v1283 = vmul.f32 %v849, %v1137
  %v1284 = vmul.f32 %v854, %v1142
  %v1285 = vmul.f32 %v859, %v1145
  %v1286 = vmul.f32 %v864, %v1150
  %v1287 = vmul.f32 %v869, %v1153
  %v1288 = vmul.f32 %v874, %v1158
  %v1289 = vmul.f32 %v879, %v1161
  %v1290 = vmul.f32 %v884, %v1166
  %v1291 = vmul.f32 %v889, %v1169
  %v1292 = vmul.f32 %v894, %v1174
  %v1293 = vmul.f32 %v899, %v1177
  %v1294 = vmul.f32 %v904, %v1182
  %v1295 = vmul.f32 %v909, %v1185
  %v1296 = vmul.f32 %v914, %v1190
  %v1297 = vmul.f32 %v919, %v1193
  %v1298 = vmul.f32 %v924, %v1198
  %v1299 = vmul.f32 %v929, %v1201
  %v1300 = vadd.f32 %v1236, %v1268
  %v1301 = vadd.f32 %v1237, %v1269
  %v1302 = vadd.f32 %v1238, %v1270
  %v1303 = vadd.f32 %v1239, %v1271
  %v1304 = vadd.f32 %v1240, %v1272
  %v1305 = vadd.f32 %v1241, %v1273
  %v1306 = vadd.f32 %v1242, %v1274
  %v1307 = vadd.f32 %v1243, %v1275
  %v1308 = vadd.f32 %v1244, %v1276
  %v1309 = vadd.f32 %v1245, %v1277
  %v1310 = vadd.f32 %v1246, %v1278
  %v1311 = vadd.f32 %v1247, %v1279
  %v1312 = vadd.f32 %v1248, %v1280
  %v1313 = vadd.f32 %v1249, %v1281
  %v1314 = vadd.f32 %v1250, %v1282
  %v1315 = vadd.f32 %v1251, %v1283
  %v1316 = vadd.f32 %v1252, %v1284
  %v1317 = vadd.f32 %v1253, %v1285
  %v1318 = vadd.f32 %v1254, %v1286
  %v1319 = vadd.f32 %v1255, %v1287
  %v1320 = vadd.f32 %v1256, %v1288
  %v1321 = vadd.f32 %v1257, %v1289
  %v1322 = vadd.f32 %v1258, %v1290
  %v1323 = vadd.f32 %v1259, %v1291
  %v1324 = vadd.f32 %v1260, %v1292
  %v1325 = vadd.f32 %v1261, %v1293
  %v1326 = vadd.f32 %v1262, %v1294
  %v1327 = vadd.f32 %v1263, %v1295
  %v1328 = vadd.f32 %v1264, %v1296
  %v1329 = vadd.f32 %v1265, %v1297
  %v1330 = vadd.f32 %v1266, %v1298
  %v1331 = vadd.f32 %v1267, %v1299
  %vm1332 = vcmask 261120
  %1333 = vst.msk [vmem:[%s4] sm:$0xff] %vm1332, %v1300
  %1334 = vst.msk [vmem:[%s4 + $0x8] sm:$0xff] %vm1332, %v1301
  %1335 = vst.msk [vmem:[%s4 + $0x10] sm:$0xff] %vm1332, %v1302
  %1336 = vst.msk [vmem:[%s4 + $0x18] sm:$0xff] %vm1332, %v1303
  %1337 = vst.msk [vmem:[%s4 + $0x20] sm:$0xff] %vm1332, %v1304
  %1338 = vst.msk [vmem:[%s4 + $0x28] sm:$0xff] %vm1332, %v1305
  %1339 = vst.msk [vmem:[%s4 + $0x30] sm:$0xff] %vm1332, %v1306
  %1340 = vst.msk [vmem:[%s4 + $0x38] sm:$0xff] %vm1332, %v1307
  %1341 = vst.msk [vmem:[%s4 + $0x40] sm:$0xff] %vm1332, %v1308
  %1342 = vst.msk [vmem:[%s4 + $0x48] sm:$0xff] %vm1332, %v1309
  %1343 = vst.msk [vmem:[%s4 + $0x50] sm:$0xff] %vm1332, %v1310
  %1344 = vst.msk [vmem:[%s4 + $0x58] sm:$0xff] %vm1332, %v1311
  %1345 = vst.msk [vmem:[%s4 + $0x60] sm:$0xff] %vm1332, %v1312
  %1346 = vst.msk [vmem:[%s4 + $0x68] sm:$0xff] %vm1332, %v1313
  %1347 = vst.msk [vmem:[%s4 + $0x70] sm:$0xff] %vm1332, %v1314
  %1348 = vst.msk [vmem:[%s4 + $0x78] sm:$0xff] %vm1332, %v1315
  %1349 = vst.msk [vmem:[%s4 + $0x80] sm:$0xff] %vm1332, %v1316
  %1350 = vst.msk [vmem:[%s4 + $0x88] sm:$0xff] %vm1332, %v1317
  %1351 = vst.msk [vmem:[%s4 + $0x90] sm:$0xff] %vm1332, %v1318
  %1352 = vst.msk [vmem:[%s4 + $0x98] sm:$0xff] %vm1332, %v1319
  %1353 = vst.msk [vmem:[%s4 + $0xa0] sm:$0xff] %vm1332, %v1320
  %1354 = vst.msk [vmem:[%s4 + $0xa8] sm:$0xff] %vm1332, %v1321
  %1355 = vst.msk [vmem:[%s4 + $0xb0] sm:$0xff] %vm1332, %v1322
  %1356 = vst.msk [vmem:[%s4 + $0xb8] sm:$0xff] %vm1332, %v1323
  %1357 = vst.msk [vmem:[%s4 + $0xc0] sm:$0xff] %vm1332, %v1324
  %1358 = vst.msk [vmem:[%s4 + $0xc8] sm:$0xff] %vm1332, %v1325
  %1359 = vst.msk [vmem:[%s4 + $0xd0] sm:$0xff] %vm1332, %v1326
  %1360 = vst.msk [vmem:[%s4 + $0xd8] sm:$0xff] %vm1332, %v1327
  %1361 = vst.msk [vmem:[%s4 + $0xe0] sm:$0xff] %vm1332, %v1328
  %1362 = vst.msk [vmem:[%s4 + $0xe8] sm:$0xff] %vm1332, %v1329
  %1363 = vst.msk [vmem:[%s4 + $0xf0] sm:$0xff] %vm1332, %v1330
  %1364 = vst.msk [vmem:[%s4 + $0xf8] sm:$0xff] %vm1332, %v1331
  // Predicated region
  $region18: #{_lambda_.5} parent=0 // pred_check
    _
  $region19: #{_lambda_.5} parent=0 // pred_check_branch
    %1366 = sbr.rel (0) target = $region21
  $region20: #{_lambda_.5} parent=0 // pred_region
    _
  $region21: #{_lambda_.5} parent=0 // pred_fallthru
    _
  // Predicated region
  $region22: #{_lambda_.5} parent=0 // pred_check
    _
  $region23: #{_lambda_.5} parent=0 // pred_check_branch
    %1368 = sbr.rel (0) target = $region25
  $region24: #{_lambda_.5} parent=0 // pred_region
    _
  $region25: #{_lambda_.5} parent=0 // pred_fallthru
    _

</llo_original>
